<compile_context>
chip_gen: v7x
topology: tpu7x:2x2x1
jax: 0.10.0
libtpu: 0.0.40
codegen_flags: <defaults>
</compile_context>

<pallas_src>
import numpy as np
import jax
import jax.numpy as jnp
from jax.experimental import pallas as pl
from jax.experimental.pallas import tpu as pltpu


def _round_up(n, m):
    return ((n + m - 1) // m) * m


# ----------------------------------------------------------------------------
# Host-side construction of constant operator matrices (once per weight update)
# ----------------------------------------------------------------------------
def _stacked_selection(d_in, h_in, do, ho, rows_in, m_pad):
    """Stacked, pad-folded selection operator, shape (9*m_pad, rows_in).

    Row t*m_pad + od*ho + oh gathers UNPADDED input row (2od+kd-1)*h_in + (2oh+kh-1)
    when that position is inside the volume; rows whose tap falls into the
    conv zero-pad (and the per-tap alignment rows m..m_pad) stay all-zero.
    Columns >= d_in*h_in (alignment rows of the previous layer) stay zero.
    """
    s = np.zeros((9 * m_pad, rows_in), np.float32)
    t = 0
    for kd in range(3):
        for kh in range(3):
            for od in range(do):
                idr = 2 * od + kd - 1
                if 0 <= idr < d_in:
                    for oh in range(ho):
                        ihr = 2 * oh + kh - 1
                        if 0 <= ihr < h_in:
                            s[t * m_pad + od * ho + oh, idr * h_in + ihr] = 1.0
            t += 1
    return s


def _band_mats(wgt, w_in, wo):
    """Pad-folded banded weights per (kd,kh) tap: (9, w_in*Cin, wo*Cout).

    Entry [t, iw*Cin+ci, ow*Cout+co] = W[co,ci,kd,kh,kw] with kw = iw+1-2*ow
    (iw is the UNPADDED width index; out-of-band taps hit the zero pad and are
    simply absent), i.e. kw taps + stride-2 along W + Cin->Cout in one matrix.
    """
    cout, cin = wgt.shape[0], wgt.shape[1]
    kw = (np.arange(w_in)[:, None] + 1) - 2 * np.arange(wo)[None, :]      # (w_in, wo)
    valid = jnp.asarray(((kw >= 0) & (kw <= 2)).astype(np.float32))
    kw_c = np.clip(kw, 0, 2)
    bands = []
    for kd in range(3):
        for kh in range(3):
            wsub = wgt[:, :, kd, kh, :]                                   # (Cout, Cin, 3)
            blk = wsub[:, :, kw_c]                                        # (Cout, Cin, w_in, wo)
            blk = jnp.transpose(blk, (2, 1, 3, 0)) * valid[:, None, :, None]
            bands.append(blk.reshape(w_in * cin, wo * cout))
    return jnp.stack(bands, axis=0)


def build_operators(conv_ws, cls_w, cls_b, spatial, batch):
    """Builds the resident VMEM operators (run once per weight update)."""
    sd, sh, sw = spatial
    c = conv_ws[0].shape[1]
    eye_b = jnp.eye(batch, dtype=jnp.float32)

    ops = []
    d_in, h_in, w_in, rows_in = sd, sh, sw, sd * sh
    for wgt in conv_ws:
        do, ho, wo = (d_in + 1) // 2, (h_in + 1) // 2, (w_in + 1) // 2
        m_pad = _round_up(do * ho, 8)                                    # 8-aligned tap blocks
        s = _stacked_selection(d_in, h_in, do, ho, rows_in, m_pad)
        ops.append(jnp.asarray(s, dtype=jnp.bfloat16))                   # 0/1: exact in bf16
        bw = _band_mats(wgt, w_in, wo)                                   # (9, w_in*C, wo*C)
        bw_bd = jnp.einsum("ij,trc->tirjc", eye_b, bw).reshape(          # block-diag over batch
            9, batch * w_in * c, batch * wo * c)
        ops.append(bw_bd.astype(jnp.bfloat16))
        d_in, h_in, w_in, rows_in = do, ho, wo, m_pad

    # Classifier fold: mean over (do,ho,wo) + Linear(in_dim, 1) -> block-diag
    # column operator carrying 1/nvox; applied to the last activation's lanes.
    nvox = d_in * h_in * w_in
    col = jnp.tile(cls_w[:, 0], (w_in,)) / float(nvox)                   # (wo*C,)
    wcls = jnp.kron(eye_b, col.reshape(-1, 1)).astype(jnp.float32)       # (B*wo*C, B)
    ops.append(wcls)
    ops.append(cls_b.reshape(1, 1).astype(jnp.float32))
    return tuple(ops)


# ----------------------------------------------------------------------------
# Fused Pallas kernel: all conv layers + mean + linear, whole batch, one step.
# ----------------------------------------------------------------------------
def _make_kernel(n_conv, m_pads):
    def kernel(*refs):
        n_in = 1 + 2 * n_conv + 2
        x_ref = refs[0]
        wcls_ref, b_ref, out_ref = refs[n_in - 2], refs[n_in - 1], refs[n_in]
        acc_refs = refs[n_in + 1:]

        act = x_ref[...]                                     # bf16 (rows, B*W*C)
        for l in range(n_conv):
            s_ref, bw_ref, acc_ref = refs[1 + 2 * l], refs[2 + 2 * l], acc_refs[l]
            if l > 0:                                        # ReLU between convs only (f32)
                act = jnp.maximum(act, 0.0).astype(jnp.bfloat16)
            # Stage 1: ONE stacked GEMM over all 9 (kd,kh) taps.
            y = jnp.dot(s_ref[...], act, preferred_element_type=jnp.float32)
            # Stage 2: per-tap banded GEMM, += into f32 VMEM scratch (MRB-friendly).
            m_pad = m_pads[l]
            for t in range(9):                               # 8-row-aligned static slices
                yt = y[t * m_pad:(t + 1) * m_pad, :].astype(jnp.bfloat16)
                zt = jnp.dot(yt, bw_ref[t], preferred_element_type=jnp.float32)
                if t == 0:
                    acc_ref[...] = zt
                else:
                    acc_ref[...] += zt
            act = acc_ref[...]                               # f32 (m_pad, B*wo*C)

        # Classifier epilogue (f32): folded mean + Linear, then bias.
        zc = jnp.dot(act, wcls_ref[...], preferred_element_type=jnp.float32)  # (m_pad, B)
        out_ref[...] = (jnp.sum(zc, axis=0, keepdims=True) + b_ref[...]).astype(out_ref.dtype)

    return kernel


def _zero_map(ndim):
    return lambda i: (0,) * ndim


# ----------------------------------------------------------------------------
# Full forward: one pallas_call, one grid step (batch folded into lanes).
# ----------------------------------------------------------------------------
@jax.jit
def conv3d_classifier_forward(preds, ops):
    """preds: (B, T, 1, D, H, W) float32; ops from build_operators -> (B, 1)."""
    x = jnp.squeeze(preds, axis=2)                           # (B, T, C=D, H, W)
    b, sd, c, sh, sw = x.shape
    # rows = (T, H) positions, lanes = (batch, W, C): lane-dense, no zero-pad.
    x0 = jnp.transpose(x, (1, 3, 0, 4, 2)).reshape(sd * sh, b * sw * c)
    x0 = x0.astype(jnp.bfloat16)

    n_conv = (len(ops) - 2) // 2
    m_pads = tuple(ops[2 * l].shape[0] // 9 for l in range(n_conv))
    out_cols = tuple(ops[2 * l + 1].shape[2] for l in range(n_conv))

    in_arrays = (x0,) + tuple(ops)
    in_specs = [pl.BlockSpec(a.shape, _zero_map(a.ndim)) for a in in_arrays]

    out = pl.pallas_call(
        _make_kernel(n_conv, m_pads),
        out_shape=jax.ShapeDtypeStruct((1, b), jnp.float32),
        grid_spec=pltpu.PrefetchScalarGridSpec(
            num_scalar_prefetch=0,
            grid=(1,),                                       # whole batch in one step
            in_specs=in_specs,
            out_specs=pl.BlockSpec((1, b), _zero_map(2)),
            scratch_shapes=[pltpu.VMEM((m_pads[l], out_cols[l]), jnp.float32)
                            for l in range(n_conv)],
        ),
        compiler_params=pltpu.CompilerParams(
            dimension_semantics=("arbitrary",),
            vmem_limit_bytes=8 * 1024 * 1024,
        ),
    )(*in_arrays)
    return out.reshape(b, 1)


# ----------------------------------------------------------------------------
# Deterministic parameter init (synthetic; matches nn.Module shapes)
# ----------------------------------------------------------------------------
def init_params(key, in_dim, num_3d_layers):
    n_conv = num_3d_layers - 1
    keys = jax.random.split(key, n_conv + 2)
    conv_ws = tuple(
        0.1 * jax.random.normal(keys[i], (in_dim, in_dim, 3, 3, 3), jnp.float32)
        for i in range(n_conv)
    )
    # torch Linear(in_dim, 1): weight (1, in_dim); stored transposed as (in_dim, 1)
    cls_w = 0.1 * jax.random.normal(keys[-2], (in_dim, 1), jnp.float32)
    cls_b = 0.1 * jax.random.normal(keys[-1], (1,), jnp.float32)
    return conv_ws, cls_w, cls_b


# ----------------------------------------------------------------------------
# Pure-JAX reference (for correctness check)
# ----------------------------------------------------------------------------
def reference_forward(preds, conv_ws, cls_w, cls_b):
    x = jnp.transpose(jnp.squeeze(preds, axis=2), (0, 2, 1, 3, 4))  # NCDHW
    n_conv = len(conv_ws)
    for i, w in enumerate(conv_ws):
        x = jax.lax.conv_general_dilated(
            x, w, window_strides=(2, 2, 2),
            padding=((1, 1), (1, 1), (1, 1)),
            dimension_numbers=("NCDHW", "OIDHW", "NCDHW"),
        )
        if i < n_conv - 1:
            x = jnp.maximum(x, 0.0)
    m = jnp.mean(x, axis=(-1, -2, -3))  # (B, C)
    return m @ cls_w + cls_b[None, :]


if __name__ == "__main__":
    key = jax.random.PRNGKey(0)
    k_in, k_par = jax.random.split(key)

    B, T, H, W = 2, 8, 8, 8
    in_dim = 8          # feature dim D of preds == Conv3d channels
    num_3d_layers = 3   # -> 2 conv layers (ReLU between them only)

    preds = jax.random.normal(k_in, (B, T, 1, in_dim, H, W), jnp.float32)
    conv_ws, cls_w, cls_b = init_params(k_par, in_dim, num_3d_layers)

    ops = build_operators(conv_ws, cls_w, cls_b, (T, H, W), B)   # once per weight update
    out = conv3d_classifier_forward(preds, ops)
    out = jax.block_until_ready(out)

    ref = reference_forward(preds, conv_ws, cls_w, cls_b)
    assert out.shape == (B, 1), out.shape
    max_err = float(jnp.max(jnp.abs(out - ref)))
    # bf16 MXU operands (activations + conv weights) vs f32 reference: expected
    # drift ~1e-3 at these scales; f32-exact behaviour is recovered by dropping
    # the bf16 casts.
    assert max_err < 1e-2, f"mismatch vs reference: {max_err}"

    print("KERNEL_OK")
</pallas_src>

<mosaic_0001>
module attributes {stable_mosaic.version = 11 : i64} {
  func.func @kernel(%arg0: i32, %arg1: memref<64x128xbf16, #tpu.memory_space<vmem>>, %arg2: memref<144x64xbf16, #tpu.memory_space<vmem>>, %arg3: memref<9x128x64xbf16, #tpu.memory_space<vmem>>, %arg4: memref<72x16xbf16, #tpu.memory_space<vmem>>, %arg5: memref<9x64x32xbf16, #tpu.memory_space<vmem>>, %arg6: memref<32x2xf32, #tpu.memory_space<vmem>>, %arg7: memref<1x1xf32, #tpu.memory_space<vmem>>, %arg8: memref<1x2xf32, #tpu.memory_space<vmem>>, %arg9: memref<16x64xf32, #tpu.memory_space<vmem>>, %arg10: memref<8x32xf32, #tpu.memory_space<vmem>>) attributes {dimension_semantics = [#tpu.dimension_semantics<arbitrary>], iteration_bounds = array<i64: 1>, scalar_prefetch = 0 : i64, scratch_operands = 2 : i64, tpu.core_type = #tpu.core_type<tc>, window_params = [{pipeline_mode = #tpu.pipeline_mode<synchronous>, transform_indices = @transform_0, window_bounds = array<i64: 64, 128>}, {pipeline_mode = #tpu.pipeline_mode<synchronous>, transform_indices = @transform_1, window_bounds = array<i64: 144, 64>}, {pipeline_mode = #tpu.pipeline_mode<synchronous>, transform_indices = @transform_2, window_bounds = array<i64: 9, 128, 64>}, {pipeline_mode = #tpu.pipeline_mode<synchronous>, transform_indices = @transform_3, window_bounds = array<i64: 72, 16>}, {pipeline_mode = #tpu.pipeline_mode<synchronous>, transform_indices = @transform_4, window_bounds = array<i64: 9, 64, 32>}, {pipeline_mode = #tpu.pipeline_mode<synchronous>, transform_indices = @transform_5, window_bounds = array<i64: 32, 2>}, {pipeline_mode = #tpu.pipeline_mode<synchronous>, transform_indices = @transform_6, window_bounds = array<i64: 1, 1>}, {pipeline_mode = #tpu.pipeline_mode<synchronous>, transform_indices = @transform_7, window_bounds = array<i64: 1, 2>}]} {
    %c0 = arith.constant 0 : index
    %c0_0 = arith.constant 0 : index
    %0 = vector.load %arg1[%c0, %c0_0] : memref<64x128xbf16, #tpu.memory_space<vmem>>, vector<64x128xbf16>
    %c0_1 = arith.constant 0 : index
    %c0_2 = arith.constant 0 : index
    %1 = vector.load %arg2[%c0_1, %c0_2] : memref<144x64xbf16, #tpu.memory_space<vmem>>, vector<144x64xbf16>
    %cst = arith.constant dense<0.000000e+00> : vector<144x128xf32>
    %2 = tpu.matmul %1, %0, %cst {dimension_numbers = #tpu.dot_dimension_numbers<[1], [0], [0], [1], [0, 0, 1, 1], [], []>} : vector<144x64xbf16>, vector<64x128xbf16>, vector<144x128xf32> -> vector<144x128xf32>
    %3 = vector.extract_strided_slice %2 {offsets = [0, 0], sizes = [16, 128], strides = [1, 1]} : vector<144x128xf32> to vector<16x128xf32>
    %4 = arith.truncf %3 : vector<16x128xf32> to vector<16x128xbf16>
    %c0_3 = arith.constant 0 : index
    %c0_4 = arith.constant 0 : index
    %c0_5 = arith.constant 0 : index
    %5 = vector.load %arg3[%c0_3, %c0_4, %c0_5] : memref<9x128x64xbf16, #tpu.memory_space<vmem>>, vector<1x128x64xbf16>
    %6 = vector.shape_cast %5 : vector<1x128x64xbf16> to vector<128x64xbf16>
    %cst_6 = arith.constant dense<0.000000e+00> : vector<16x64xf32>
    %7 = tpu.matmul %4, %6, %cst_6 {dimension_numbers = #tpu.dot_dimension_numbers<[1], [0], [0], [1], [0, 0, 1, 1], [], []>} : vector<16x128xbf16>, vector<128x64xbf16>, vector<16x64xf32> -> vector<16x64xf32>
    %c0_7 = arith.constant 0 : index
    %c0_8 = arith.constant 0 : index
    %8 = vector.load %arg9[%c0_7, %c0_8] : memref<16x64xf32, #tpu.memory_space<vmem>>, vector<16x64xf32>
    tpu.vector_store %arg9[%c0_7, %c0_8], %7 {strides = array<i32>} : memref<16x64xf32, #tpu.memory_space<vmem>>, vector<16x64xf32>,
    %9 = vector.extract_strided_slice %2 {offsets = [16, 0], sizes = [16, 128], strides = [1, 1]} : vector<144x128xf32> to vector<16x128xf32>
    %10 = arith.truncf %9 : vector<16x128xf32> to vector<16x128xbf16>
    %c1 = arith.constant 1 : index
    %c0_9 = arith.constant 0 : index
    %c0_10 = arith.constant 0 : index
    %11 = vector.load %arg3[%c1, %c0_9, %c0_10] : memref<9x128x64xbf16, #tpu.memory_space<vmem>>, vector<1x128x64xbf16>
    %12 = vector.shape_cast %11 : vector<1x128x64xbf16> to vector<128x64xbf16>
    %cst_11 = arith.constant dense<0.000000e+00> : vector<16x64xf32>
    %13 = tpu.matmul %10, %12, %cst_11 {dimension_numbers = #tpu.dot_dimension_numbers<[1], [0], [0], [1], [0, 0, 1, 1], [], []>} : vector<16x128xbf16>, vector<128x64xbf16>, vector<16x64xf32> -> vector<16x64xf32>
    %c0_12 = arith.constant 0 : index
    %c0_13 = arith.constant 0 : index
    %14 = vector.load %arg9[%c0_12, %c0_13] : memref<16x64xf32, #tpu.memory_space<vmem>>, vector<16x64xf32>
    %15 = arith.addf %14, %13 : vector<16x64xf32>
    %c0_14 = arith.constant 0 : index
    %c0_15 = arith.constant 0 : index
    %16 = vector.load %arg9[%c0_14, %c0_15] : memref<16x64xf32, #tpu.memory_space<vmem>>, vector<16x64xf32>
    tpu.vector_store %arg9[%c0_14, %c0_15], %15 {strides = array<i32>} : memref<16x64xf32, #tpu.memory_space<vmem>>, vector<16x64xf32>,
    %17 = vector.extract_strided_slice %2 {offsets = [32, 0], sizes = [16, 128], strides = [1, 1]} : vector<144x128xf32> to vector<16x128xf32>
    %18 = arith.truncf %17 : vector<16x128xf32> to vector<16x128xbf16>
    %c2 = arith.constant 2 : index
    %c0_16 = arith.constant 0 : index
    %c0_17 = arith.constant 0 : index
    %19 = vector.load %arg3[%c2, %c0_16, %c0_17] : memref<9x128x64xbf16, #tpu.memory_space<vmem>>, vector<1x128x64xbf16>
    %20 = vector.shape_cast %19 : vector<1x128x64xbf16> to vector<128x64xbf16>
    %cst_18 = arith.constant dense<0.000000e+00> : vector<16x64xf32>
    %21 = tpu.matmul %18, %20, %cst_18 {dimension_numbers = #tpu.dot_dimension_numbers<[1], [0], [0], [1], [0, 0, 1, 1], [], []>} : vector<16x128xbf16>, vector<128x64xbf16>, vector<16x64xf32> -> vector<16x64xf32>
    %c0_19 = arith.constant 0 : index
    %c0_20 = arith.constant 0 : index
    %22 = vector.load %arg9[%c0_19, %c0_20] : memref<16x64xf32, #tpu.memory_space<vmem>>, vector<16x64xf32>
    %23 = arith.addf %22, %21 : vector<16x64xf32>
    %c0_21 = arith.constant 0 : index
    %c0_22 = arith.constant 0 : index
    %24 = vector.load %arg9[%c0_21, %c0_22] : memref<16x64xf32, #tpu.memory_space<vmem>>, vector<16x64xf32>
    tpu.vector_store %arg9[%c0_21, %c0_22], %23 {strides = array<i32>} : memref<16x64xf32, #tpu.memory_space<vmem>>, vector<16x64xf32>,
    %25 = vector.extract_strided_slice %2 {offsets = [48, 0], sizes = [16, 128], strides = [1, 1]} : vector<144x128xf32> to vector<16x128xf32>
    %26 = arith.truncf %25 : vector<16x128xf32> to vector<16x128xbf16>
    %c3 = arith.constant 3 : index
    %c0_23 = arith.constant 0 : index
    %c0_24 = arith.constant 0 : index
    %27 = vector.load %arg3[%c3, %c0_23, %c0_24] : memref<9x128x64xbf16, #tpu.memory_space<vmem>>, vector<1x128x64xbf16>
    %28 = vector.shape_cast %27 : vector<1x128x64xbf16> to vector<128x64xbf16>
    %cst_25 = arith.constant dense<0.000000e+00> : vector<16x64xf32>
    %29 = tpu.matmul %26, %28, %cst_25 {dimension_numbers = #tpu.dot_dimension_numbers<[1], [0], [0], [1], [0, 0, 1, 1], [], []>} : vector<16x128xbf16>, vector<128x64xbf16>, vector<16x64xf32> -> vector<16x64xf32>
    %c0_26 = arith.constant 0 : index
    %c0_27 = arith.constant 0 : index
    %30 = vector.load %arg9[%c0_26, %c0_27] : memref<16x64xf32, #tpu.memory_space<vmem>>, vector<16x64xf32>
    %31 = arith.addf %30, %29 : vector<16x64xf32>
    %c0_28 = arith.constant 0 : index
    %c0_29 = arith.constant 0 : index
    %32 = vector.load %arg9[%c0_28, %c0_29] : memref<16x64xf32, #tpu.memory_space<vmem>>, vector<16x64xf32>
    tpu.vector_store %arg9[%c0_28, %c0_29], %31 {strides = array<i32>} : memref<16x64xf32, #tpu.memory_space<vmem>>, vector<16x64xf32>,
    %33 = vector.extract_strided_slice %2 {offsets = [64, 0], sizes = [16, 128], strides = [1, 1]} : vector<144x128xf32> to vector<16x128xf32>
    %34 = arith.truncf %33 : vector<16x128xf32> to vector<16x128xbf16>
    %c4 = arith.constant 4 : index
    %c0_30 = arith.constant 0 : index
    %c0_31 = arith.constant 0 : index
    %35 = vector.load %arg3[%c4, %c0_30, %c0_31] : memref<9x128x64xbf16, #tpu.memory_space<vmem>>, vector<1x128x64xbf16>
    %36 = vector.shape_cast %35 : vector<1x128x64xbf16> to vector<128x64xbf16>
    %cst_32 = arith.constant dense<0.000000e+00> : vector<16x64xf32>
    %37 = tpu.matmul %34, %36, %cst_32 {dimension_numbers = #tpu.dot_dimension_numbers<[1], [0], [0], [1], [0, 0, 1, 1], [], []>} : vector<16x128xbf16>, vector<128x64xbf16>, vector<16x64xf32> -> vector<16x64xf32>
    %c0_33 = arith.constant 0 : index
    %c0_34 = arith.constant 0 : index
    %38 = vector.load %arg9[%c0_33, %c0_34] : memref<16x64xf32, #tpu.memory_space<vmem>>, vector<16x64xf32>
    %39 = arith.addf %38, %37 : vector<16x64xf32>
    %c0_35 = arith.constant 0 : index
    %c0_36 = arith.constant 0 : index
    %40 = vector.load %arg9[%c0_35, %c0_36] : memref<16x64xf32, #tpu.memory_space<vmem>>, vector<16x64xf32>
    tpu.vector_store %arg9[%c0_35, %c0_36], %39 {strides = array<i32>} : memref<16x64xf32, #tpu.memory_space<vmem>>, vector<16x64xf32>,
    %41 = vector.extract_strided_slice %2 {offsets = [80, 0], sizes = [16, 128], strides = [1, 1]} : vector<144x128xf32> to vector<16x128xf32>
    %42 = arith.truncf %41 : vector<16x128xf32> to vector<16x128xbf16>
    %c5 = arith.constant 5 : index
    %c0_37 = arith.constant 0 : index
    %c0_38 = arith.constant 0 : index
    %43 = vector.load %arg3[%c5, %c0_37, %c0_38] : memref<9x128x64xbf16, #tpu.memory_space<vmem>>, vector<1x128x64xbf16>
    %44 = vector.shape_cast %43 : vector<1x128x64xbf16> to vector<128x64xbf16>
    %cst_39 = arith.constant dense<0.000000e+00> : vector<16x64xf32>
    %45 = tpu.matmul %42, %44, %cst_39 {dimension_numbers = #tpu.dot_dimension_numbers<[1], [0], [0], [1], [0, 0, 1, 1], [], []>} : vector<16x128xbf16>, vector<128x64xbf16>, vector<16x64xf32> -> vector<16x64xf32>
    %c0_40 = arith.constant 0 : index
    %c0_41 = arith.constant 0 : index
    %46 = vector.load %arg9[%c0_40, %c0_41] : memref<16x64xf32, #tpu.memory_space<vmem>>, vector<16x64xf32>
    %47 = arith.addf %46, %45 : vector<16x64xf32>
    %c0_42 = arith.constant 0 : index
    %c0_43 = arith.constant 0 : index
    %48 = vector.load %arg9[%c0_42, %c0_43] : memref<16x64xf32, #tpu.memory_space<vmem>>, vector<16x64xf32>
    tpu.vector_store %arg9[%c0_42, %c0_43], %47 {strides = array<i32>} : memref<16x64xf32, #tpu.memory_space<vmem>>, vector<16x64xf32>,
    %49 = vector.extract_strided_slice %2 {offsets = [96, 0], sizes = [16, 128], strides = [1, 1]} : vector<144x128xf32> to vector<16x128xf32>
    %50 = arith.truncf %49 : vector<16x128xf32> to vector<16x128xbf16>
    %c6 = arith.constant 6 : index
    %c0_44 = arith.constant 0 : index
    %c0_45 = arith.constant 0 : index
    %51 = vector.load %arg3[%c6, %c0_44, %c0_45] : memref<9x128x64xbf16, #tpu.memory_space<vmem>>, vector<1x128x64xbf16>
    %52 = vector.shape_cast %51 : vector<1x128x64xbf16> to vector<128x64xbf16>
    %cst_46 = arith.constant dense<0.000000e+00> : vector<16x64xf32>
    %53 = tpu.matmul %50, %52, %cst_46 {dimension_numbers = #tpu.dot_dimension_numbers<[1], [0], [0], [1], [0, 0, 1, 1], [], []>} : vector<16x128xbf16>, vector<128x64xbf16>, vector<16x64xf32> -> vector<16x64xf32>
    %c0_47 = arith.constant 0 : index
    %c0_48 = arith.constant 0 : index
    %54 = vector.load %arg9[%c0_47, %c0_48] : memref<16x64xf32, #tpu.memory_space<vmem>>, vector<16x64xf32>
    %55 = arith.addf %54, %53 : vector<16x64xf32>
    %c0_49 = arith.constant 0 : index
    %c0_50 = arith.constant 0 : index
    %56 = vector.load %arg9[%c0_49, %c0_50] : memref<16x64xf32, #tpu.memory_space<vmem>>, vector<16x64xf32>
    tpu.vector_store %arg9[%c0_49, %c0_50], %55 {strides = array<i32>} : memref<16x64xf32, #tpu.memory_space<vmem>>, vector<16x64xf32>,
    %57 = vector.extract_strided_slice %2 {offsets = [112, 0], sizes = [16, 128], strides = [1, 1]} : vector<144x128xf32> to vector<16x128xf32>
    %58 = arith.truncf %57 : vector<16x128xf32> to vector<16x128xbf16>
    %c7 = arith.constant 7 : index
    %c0_51 = arith.constant 0 : index
    %c0_52 = arith.constant 0 : index
    %59 = vector.load %arg3[%c7, %c0_51, %c0_52] : memref<9x128x64xbf16, #tpu.memory_space<vmem>>, vector<1x128x64xbf16>
    %60 = vector.shape_cast %59 : vector<1x128x64xbf16> to vector<128x64xbf16>
    %cst_53 = arith.constant dense<0.000000e+00> : vector<16x64xf32>
    %61 = tpu.matmul %58, %60, %cst_53 {dimension_numbers = #tpu.dot_dimension_numbers<[1], [0], [0], [1], [0, 0, 1, 1], [], []>} : vector<16x128xbf16>, vector<128x64xbf16>, vector<16x64xf32> -> vector<16x64xf32>
    %c0_54 = arith.constant 0 : index
    %c0_55 = arith.constant 0 : index
    %62 = vector.load %arg9[%c0_54, %c0_55] : memref<16x64xf32, #tpu.memory_space<vmem>>, vector<16x64xf32>
    %63 = arith.addf %62, %61 : vector<16x64xf32>
    %c0_56 = arith.constant 0 : index
    %c0_57 = arith.constant 0 : index
    %64 = vector.load %arg9[%c0_56, %c0_57] : memref<16x64xf32, #tpu.memory_space<vmem>>, vector<16x64xf32>
    tpu.vector_store %arg9[%c0_56, %c0_57], %63 {strides = array<i32>} : memref<16x64xf32, #tpu.memory_space<vmem>>, vector<16x64xf32>,
    %65 = vector.extract_strided_slice %2 {offsets = [128, 0], sizes = [16, 128], strides = [1, 1]} : vector<144x128xf32> to vector<16x128xf32>
    %66 = arith.truncf %65 : vector<16x128xf32> to vector<16x128xbf16>
    %c8 = arith.constant 8 : index
    %c0_58 = arith.constant 0 : index
    %c0_59 = arith.constant 0 : index
    %67 = vector.load %arg3[%c8, %c0_58, %c0_59] : memref<9x128x64xbf16, #tpu.memory_space<vmem>>, vector<1x128x64xbf16>
    %68 = vector.shape_cast %67 : vector<1x128x64xbf16> to vector<128x64xbf16>
    %cst_60 = arith.constant dense<0.000000e+00> : vector<16x64xf32>
    %69 = tpu.matmul %66, %68, %cst_60 {dimension_numbers = #tpu.dot_dimension_numbers<[1], [0], [0], [1], [0, 0, 1, 1], [], []>} : vector<16x128xbf16>, vector<128x64xbf16>, vector<16x64xf32> -> vector<16x64xf32>
    %c0_61 = arith.constant 0 : index
    %c0_62 = arith.constant 0 : index
    %70 = vector.load %arg9[%c0_61, %c0_62] : memref<16x64xf32, #tpu.memory_space<vmem>>, vector<16x64xf32>
    %71 = arith.addf %70, %69 : vector<16x64xf32>
    %c0_63 = arith.constant 0 : index
    %c0_64 = arith.constant 0 : index
    %72 = vector.load %arg9[%c0_63, %c0_64] : memref<16x64xf32, #tpu.memory_space<vmem>>, vector<16x64xf32>
    tpu.vector_store %arg9[%c0_63, %c0_64], %71 {strides = array<i32>} : memref<16x64xf32, #tpu.memory_space<vmem>>, vector<16x64xf32>,
    %c0_65 = arith.constant 0 : index
    %c0_66 = arith.constant 0 : index
    %73 = vector.load %arg9[%c0_65, %c0_66] : memref<16x64xf32, #tpu.memory_space<vmem>>, vector<16x64xf32>
    %cst_67 = arith.constant 0.000000e+00 : f32
    %74 = vector.broadcast %cst_67 : f32 to vector<16x64xf32>
    %75 = arith.maximumf %73, %74 : vector<16x64xf32>
    %76 = arith.truncf %75 : vector<16x64xf32> to vector<16x64xbf16>
    %c0_68 = arith.constant 0 : index
    %c0_69 = arith.constant 0 : index
    %77 = vector.load %arg4[%c0_68, %c0_69] : memref<72x16xbf16, #tpu.memory_space<vmem>>, vector<72x16xbf16>
    %cst_70 = arith.constant dense<0.000000e+00> : vector<72x64xf32>
    %78 = tpu.matmul %77, %76, %cst_70 {dimension_numbers = #tpu.dot_dimension_numbers<[1], [0], [0], [1], [0, 0, 1, 1], [], []>} : vector<72x16xbf16>, vector<16x64xbf16>, vector<72x64xf32> -> vector<72x64xf32>
    %79 = vector.extract_strided_slice %78 {offsets = [0, 0], sizes = [8, 64], strides = [1, 1]} : vector<72x64xf32> to vector<8x64xf32>
    %80 = arith.truncf %79 : vector<8x64xf32> to vector<8x64xbf16>
    %c0_71 = arith.constant 0 : index
    %c0_72 = arith.constant 0 : index
    %c0_73 = arith.constant 0 : index
    %81 = vector.load %arg5[%c0_71, %c0_72, %c0_73] : memref<9x64x32xbf16, #tpu.memory_space<vmem>>, vector<1x64x32xbf16>
    %82 = vector.shape_cast %81 : vector<1x64x32xbf16> to vector<64x32xbf16>
    %cst_74 = arith.constant dense<0.000000e+00> : vector<8x32xf32>
    %83 = tpu.matmul %80, %82, %cst_74 {dimension_numbers = #tpu.dot_dimension_numbers<[1], [0], [0], [1], [0, 0, 1, 1], [], []>} : vector<8x64xbf16>, vector<64x32xbf16>, vector<8x32xf32> -> vector<8x32xf32>
    %c0_75 = arith.constant 0 : index
    %c0_76 = arith.constant 0 : index
    %84 = vector.load %arg10[%c0_75, %c0_76] : memref<8x32xf32, #tpu.memory_space<vmem>>, vector<8x32xf32>
    tpu.vector_store %arg10[%c0_75, %c0_76], %83 {strides = array<i32>} : memref<8x32xf32, #tpu.memory_space<vmem>>, vector<8x32xf32>,
    %85 = vector.extract_strided_slice %78 {offsets = [8, 0], sizes = [8, 64], strides = [1, 1]} : vector<72x64xf32> to vector<8x64xf32>
    %86 = arith.truncf %85 : vector<8x64xf32> to vector<8x64xbf16>
    %c1_77 = arith.constant 1 : index
    %c0_78 = arith.constant 0 : index
    %c0_79 = arith.constant 0 : index
    %87 = vector.load %arg5[%c1_77, %c0_78, %c0_79] : memref<9x64x32xbf16, #tpu.memory_space<vmem>>, vector<1x64x32xbf16>
    %88 = vector.shape_cast %87 : vector<1x64x32xbf16> to vector<64x32xbf16>
    %cst_80 = arith.constant dense<0.000000e+00> : vector<8x32xf32>
    %89 = tpu.matmul %86, %88, %cst_80 {dimension_numbers = #tpu.dot_dimension_numbers<[1], [0], [0], [1], [0, 0, 1, 1], [], []>} : vector<8x64xbf16>, vector<64x32xbf16>, vector<8x32xf32> -> vector<8x32xf32>
    %c0_81 = arith.constant 0 : index
    %c0_82 = arith.constant 0 : index
    %90 = vector.load %arg10[%c0_81, %c0_82] : memref<8x32xf32, #tpu.memory_space<vmem>>, vector<8x32xf32>
    %91 = arith.addf %90, %89 : vector<8x32xf32>
    %c0_83 = arith.constant 0 : index
    %c0_84 = arith.constant 0 : index
    %92 = vector.load %arg10[%c0_83, %c0_84] : memref<8x32xf32, #tpu.memory_space<vmem>>, vector<8x32xf32>
    tpu.vector_store %arg10[%c0_83, %c0_84], %91 {strides = array<i32>} : memref<8x32xf32, #tpu.memory_space<vmem>>, vector<8x32xf32>,
    %93 = vector.extract_strided_slice %78 {offsets = [16, 0], sizes = [8, 64], strides = [1, 1]} : vector<72x64xf32> to vector<8x64xf32>
    %94 = arith.truncf %93 : vector<8x64xf32> to vector<8x64xbf16>
    %c2_85 = arith.constant 2 : index
    %c0_86 = arith.constant 0 : index
    %c0_87 = arith.constant 0 : index
    %95 = vector.load %arg5[%c2_85, %c0_86, %c0_87] : memref<9x64x32xbf16, #tpu.memory_space<vmem>>, vector<1x64x32xbf16>
    %96 = vector.shape_cast %95 : vector<1x64x32xbf16> to vector<64x32xbf16>
    %cst_88 = arith.constant dense<0.000000e+00> : vector<8x32xf32>
    %97 = tpu.matmul %94, %96, %cst_88 {dimension_numbers = #tpu.dot_dimension_numbers<[1], [0], [0], [1], [0, 0, 1, 1], [], []>} : vector<8x64xbf16>, vector<64x32xbf16>, vector<8x32xf32> -> vector<8x32xf32>
    %c0_89 = arith.constant 0 : index
    %c0_90 = arith.constant 0 : index
    %98 = vector.load %arg10[%c0_89, %c0_90] : memref<8x32xf32, #tpu.memory_space<vmem>>, vector<8x32xf32>
    %99 = arith.addf %98, %97 : vector<8x32xf32>
    %c0_91 = arith.constant 0 : index
    %c0_92 = arith.constant 0 : index
    %100 = vector.load %arg10[%c0_91, %c0_92] : memref<8x32xf32, #tpu.memory_space<vmem>>, vector<8x32xf32>
    tpu.vector_store %arg10[%c0_91, %c0_92], %99 {strides = array<i32>} : memref<8x32xf32, #tpu.memory_space<vmem>>, vector<8x32xf32>,
    %101 = vector.extract_strided_slice %78 {offsets = [24, 0], sizes = [8, 64], strides = [1, 1]} : vector<72x64xf32> to vector<8x64xf32>
    %102 = arith.truncf %101 : vector<8x64xf32> to vector<8x64xbf16>
    %c3_93 = arith.constant 3 : index
    %c0_94 = arith.constant 0 : index
    %c0_95 = arith.constant 0 : index
    %103 = vector.load %arg5[%c3_93, %c0_94, %c0_95] : memref<9x64x32xbf16, #tpu.memory_space<vmem>>, vector<1x64x32xbf16>
    %104 = vector.shape_cast %103 : vector<1x64x32xbf16> to vector<64x32xbf16>
    %cst_96 = arith.constant dense<0.000000e+00> : vector<8x32xf32>
    %105 = tpu.matmul %102, %104, %cst_96 {dimension_numbers = #tpu.dot_dimension_numbers<[1], [0], [0], [1], [0, 0, 1, 1], [], []>} : vector<8x64xbf16>, vector<64x32xbf16>, vector<8x32xf32> -> vector<8x32xf32>
    %c0_97 = arith.constant 0 : index
    %c0_98 = arith.constant 0 : index
    %106 = vector.load %arg10[%c0_97, %c0_98] : memref<8x32xf32, #tpu.memory_space<vmem>>, vector<8x32xf32>
    %107 = arith.addf %106, %105 : vector<8x32xf32>
    %c0_99 = arith.constant 0 : index
    %c0_100 = arith.constant 0 : index
    %108 = vector.load %arg10[%c0_99, %c0_100] : memref<8x32xf32, #tpu.memory_space<vmem>>, vector<8x32xf32>
    tpu.vector_store %arg10[%c0_99, %c0_100], %107 {strides = array<i32>} : memref<8x32xf32, #tpu.memory_space<vmem>>, vector<8x32xf32>,
    %109 = vector.extract_strided_slice %78 {offsets = [32, 0], sizes = [8, 64], strides = [1, 1]} : vector<72x64xf32> to vector<8x64xf32>
    %110 = arith.truncf %109 : vector<8x64xf32> to vector<8x64xbf16>
    %c4_101 = arith.constant 4 : index
    %c0_102 = arith.constant 0 : index
    %c0_103 = arith.constant 0 : index
    %111 = vector.load %arg5[%c4_101, %c0_102, %c0_103] : memref<9x64x32xbf16, #tpu.memory_space<vmem>>, vector<1x64x32xbf16>
    %112 = vector.shape_cast %111 : vector<1x64x32xbf16> to vector<64x32xbf16>
    %cst_104 = arith.constant dense<0.000000e+00> : vector<8x32xf32>
    %113 = tpu.matmul %110, %112, %cst_104 {dimension_numbers = #tpu.dot_dimension_numbers<[1], [0], [0], [1], [0, 0, 1, 1], [], []>} : vector<8x64xbf16>, vector<64x32xbf16>, vector<8x32xf32> -> vector<8x32xf32>
    %c0_105 = arith.constant 0 : index
    %c0_106 = arith.constant 0 : index
    %114 = vector.load %arg10[%c0_105, %c0_106] : memref<8x32xf32, #tpu.memory_space<vmem>>, vector<8x32xf32>
    %115 = arith.addf %114, %113 : vector<8x32xf32>
    %c0_107 = arith.constant 0 : index
    %c0_108 = arith.constant 0 : index
    %116 = vector.load %arg10[%c0_107, %c0_108] : memref<8x32xf32, #tpu.memory_space<vmem>>, vector<8x32xf32>
    tpu.vector_store %arg10[%c0_107, %c0_108], %115 {strides = array<i32>} : memref<8x32xf32, #tpu.memory_space<vmem>>, vector<8x32xf32>,
    %117 = vector.extract_strided_slice %78 {offsets = [40, 0], sizes = [8, 64], strides = [1, 1]} : vector<72x64xf32> to vector<8x64xf32>
    %118 = arith.truncf %117 : vector<8x64xf32> to vector<8x64xbf16>
    %c5_109 = arith.constant 5 : index
    %c0_110 = arith.constant 0 : index
    %c0_111 = arith.constant 0 : index
    %119 = vector.load %arg5[%c5_109, %c0_110, %c0_111] : memref<9x64x32xbf16, #tpu.memory_space<vmem>>, vector<1x64x32xbf16>
    %120 = vector.shape_cast %119 : vector<1x64x32xbf16> to vector<64x32xbf16>
    %cst_112 = arith.constant dense<0.000000e+00> : vector<8x32xf32>
    %121 = tpu.matmul %118, %120, %cst_112 {dimension_numbers = #tpu.dot_dimension_numbers<[1], [0], [0], [1], [0, 0, 1, 1], [], []>} : vector<8x64xbf16>, vector<64x32xbf16>, vector<8x32xf32> -> vector<8x32xf32>
    %c0_113 = arith.constant 0 : index
    %c0_114 = arith.constant 0 : index
    %122 = vector.load %arg10[%c0_113, %c0_114] : memref<8x32xf32, #tpu.memory_space<vmem>>, vector<8x32xf32>
    %123 = arith.addf %122, %121 : vector<8x32xf32>
    %c0_115 = arith.constant 0 : index
    %c0_116 = arith.constant 0 : index
    %124 = vector.load %arg10[%c0_115, %c0_116] : memref<8x32xf32, #tpu.memory_space<vmem>>, vector<8x32xf32>
    tpu.vector_store %arg10[%c0_115, %c0_116], %123 {strides = array<i32>} : memref<8x32xf32, #tpu.memory_space<vmem>>, vector<8x32xf32>,
    %125 = vector.extract_strided_slice %78 {offsets = [48, 0], sizes = [8, 64], strides = [1, 1]} : vector<72x64xf32> to vector<8x64xf32>
    %126 = arith.truncf %125 : vector<8x64xf32> to vector<8x64xbf16>
    %c6_117 = arith.constant 6 : index
    %c0_118 = arith.constant 0 : index
    %c0_119 = arith.constant 0 : index
    %127 = vector.load %arg5[%c6_117, %c0_118, %c0_119] : memref<9x64x32xbf16, #tpu.memory_space<vmem>>, vector<1x64x32xbf16>
    %128 = vector.shape_cast %127 : vector<1x64x32xbf16> to vector<64x32xbf16>
    %cst_120 = arith.constant dense<0.000000e+00> : vector<8x32xf32>
    %129 = tpu.matmul %126, %128, %cst_120 {dimension_numbers = #tpu.dot_dimension_numbers<[1], [0], [0], [1], [0, 0, 1, 1], [], []>} : vector<8x64xbf16>, vector<64x32xbf16>, vector<8x32xf32> -> vector<8x32xf32>
    %c0_121 = arith.constant 0 : index
    %c0_122 = arith.constant 0 : index
    %130 = vector.load %arg10[%c0_121, %c0_122] : memref<8x32xf32, #tpu.memory_space<vmem>>, vector<8x32xf32>
    %131 = arith.addf %130, %129 : vector<8x32xf32>
    %c0_123 = arith.constant 0 : index
    %c0_124 = arith.constant 0 : index
    %132 = vector.load %arg10[%c0_123, %c0_124] : memref<8x32xf32, #tpu.memory_space<vmem>>, vector<8x32xf32>
    tpu.vector_store %arg10[%c0_123, %c0_124], %131 {strides = array<i32>} : memref<8x32xf32, #tpu.memory_space<vmem>>, vector<8x32xf32>,
    %133 = vector.extract_strided_slice %78 {offsets = [56, 0], sizes = [8, 64], strides = [1, 1]} : vector<72x64xf32> to vector<8x64xf32>
    %134 = arith.truncf %133 : vector<8x64xf32> to vector<8x64xbf16>
    %c7_125 = arith.constant 7 : index
    %c0_126 = arith.constant 0 : index
    %c0_127 = arith.constant 0 : index
    %135 = vector.load %arg5[%c7_125, %c0_126, %c0_127] : memref<9x64x32xbf16, #tpu.memory_space<vmem>>, vector<1x64x32xbf16>
    %136 = vector.shape_cast %135 : vector<1x64x32xbf16> to vector<64x32xbf16>
    %cst_128 = arith.constant dense<0.000000e+00> : vector<8x32xf32>
    %137 = tpu.matmul %134, %136, %cst_128 {dimension_numbers = #tpu.dot_dimension_numbers<[1], [0], [0], [1], [0, 0, 1, 1], [], []>} : vector<8x64xbf16>, vector<64x32xbf16>, vector<8x32xf32> -> vector<8x32xf32>
    %c0_129 = arith.constant 0 : index
    %c0_130 = arith.constant 0 : index
    %138 = vector.load %arg10[%c0_129, %c0_130] : memref<8x32xf32, #tpu.memory_space<vmem>>, vector<8x32xf32>
    %139 = arith.addf %138, %137 : vector<8x32xf32>
    %c0_131 = arith.constant 0 : index
    %c0_132 = arith.constant 0 : index
    %140 = vector.load %arg10[%c0_131, %c0_132] : memref<8x32xf32, #tpu.memory_space<vmem>>, vector<8x32xf32>
    tpu.vector_store %arg10[%c0_131, %c0_132], %139 {strides = array<i32>} : memref<8x32xf32, #tpu.memory_space<vmem>>, vector<8x32xf32>,
    %141 = vector.extract_strided_slice %78 {offsets = [64, 0], sizes = [8, 64], strides = [1, 1]} : vector<72x64xf32> to vector<8x64xf32>
    %142 = arith.truncf %141 : vector<8x64xf32> to vector<8x64xbf16>
    %c8_133 = arith.constant 8 : index
    %c0_134 = arith.constant 0 : index
    %c0_135 = arith.constant 0 : index
    %143 = vector.load %arg5[%c8_133, %c0_134, %c0_135] : memref<9x64x32xbf16, #tpu.memory_space<vmem>>, vector<1x64x32xbf16>
    %144 = vector.shape_cast %143 : vector<1x64x32xbf16> to vector<64x32xbf16>
    %cst_136 = arith.constant dense<0.000000e+00> : vector<8x32xf32>
    %145 = tpu.matmul %142, %144, %cst_136 {dimension_numbers = #tpu.dot_dimension_numbers<[1], [0], [0], [1], [0, 0, 1, 1], [], []>} : vector<8x64xbf16>, vector<64x32xbf16>, vector<8x32xf32> -> vector<8x32xf32>
    %c0_137 = arith.constant 0 : index
    %c0_138 = arith.constant 0 : index
    %146 = vector.load %arg10[%c0_137, %c0_138] : memref<8x32xf32, #tpu.memory_space<vmem>>, vector<8x32xf32>
    %147 = arith.addf %146, %145 : vector<8x32xf32>
    %c0_139 = arith.constant 0 : index
    %c0_140 = arith.constant 0 : index
    %148 = vector.load %arg10[%c0_139, %c0_140] : memref<8x32xf32, #tpu.memory_space<vmem>>, vector<8x32xf32>
    tpu.vector_store %arg10[%c0_139, %c0_140], %147 {strides = array<i32>} : memref<8x32xf32, #tpu.memory_space<vmem>>, vector<8x32xf32>,
    %c0_141 = arith.constant 0 : index
    %c0_142 = arith.constant 0 : index
    %149 = vector.load %arg10[%c0_141, %c0_142] : memref<8x32xf32, #tpu.memory_space<vmem>>, vector<8x32xf32>
    %c0_143 = arith.constant 0 : index
    %c0_144 = arith.constant 0 : index
    %150 = vector.load %arg6[%c0_143, %c0_144] : memref<32x2xf32, #tpu.memory_space<vmem>>, vector<32x2xf32>
    %cst_145 = arith.constant dense<0.000000e+00> : vector<8x2xf32>
    %151 = tpu.matmul %149, %150, %cst_145 {dimension_numbers = #tpu.dot_dimension_numbers<[1], [0], [0], [1], [0, 0, 1, 1], [], []>} : vector<8x32xf32>, vector<32x2xf32>, vector<8x2xf32> -> vector<8x2xf32>
    %cst_146 = arith.constant dense<0.000000e+00> : vector<2xf32>
    %152 = vector.multi_reduction <add>, %151, %cst_146 [0] : vector<8x2xf32> to vector<2xf32>
    %153 = vector.shape_cast %152 : vector<2xf32> to vector<1x2xf32>
    %c0_147 = arith.constant 0 : index
    %c0_148 = arith.constant 0 : index
    %154 = vector.load %arg7[%c0_147, %c0_148] : memref<1x1xf32, #tpu.memory_space<vmem>>, vector<1x1xf32>
    %155 = vector.broadcast %154 : vector<1x1xf32> to vector<1x2xf32>
    %156 = arith.addf %153, %155 : vector<1x2xf32>
    %c0_149 = arith.constant 0 : index
    %c0_150 = arith.constant 0 : index
    %157 = vector.load %arg8[%c0_149, %c0_150] : memref<1x2xf32, #tpu.memory_space<vmem>>, vector<1x2xf32>
    tpu.vector_store %arg8[%c0_149, %c0_150], %156 {strides = array<i32>} : memref<1x2xf32, #tpu.memory_space<vmem>>, vector<1x2xf32>,
    return
  }
  func.func @transform_0(%arg0: i32) -> (i32, i32) {
    %c0_i32 = arith.constant 0 : i32
    %c0_i32_0 = arith.constant 0 : i32
    %c0_i32_1 = arith.constant 0 : i32
    return %c0_i32, %c0_i32_0 : i32, i32
  }
  func.func @transform_1(%arg0: i32) -> (i32, i32) {
    %c0_i32 = arith.constant 0 : i32
    %c0_i32_0 = arith.constant 0 : i32
    %c0_i32_1 = arith.constant 0 : i32
    return %c0_i32, %c0_i32_0 : i32, i32
  }
  func.func @transform_2(%arg0: i32) -> (i32, i32, i32) {
    %c0_i32 = arith.constant 0 : i32
    %c0_i32_0 = arith.constant 0 : i32
    %c0_i32_1 = arith.constant 0 : i32
    %c0_i32_2 = arith.constant 0 : i32
    return %c0_i32, %c0_i32_0, %c0_i32_1 : i32, i32, i32
  }
  func.func @transform_3(%arg0: i32) -> (i32, i32) {
    %c0_i32 = arith.constant 0 : i32
    %c0_i32_0 = arith.constant 0 : i32
    %c0_i32_1 = arith.constant 0 : i32
    return %c0_i32, %c0_i32_0 : i32, i32
  }
  func.func @transform_4(%arg0: i32) -> (i32, i32, i32) {
    %c0_i32 = arith.constant 0 : i32
    %c0_i32_0 = arith.constant 0 : i32
    %c0_i32_1 = arith.constant 0 : i32
    %c0_i32_2 = arith.constant 0 : i32
    return %c0_i32, %c0_i32_0, %c0_i32_1 : i32, i32, i32
  }
  func.func @transform_5(%arg0: i32) -> (i32, i32) {
    %c0_i32 = arith.constant 0 : i32
    %c0_i32_0 = arith.constant 0 : i32
    %c0_i32_1 = arith.constant 0 : i32
    return %c0_i32, %c0_i32_0 : i32, i32
  }
  func.func @transform_6(%arg0: i32) -> (i32, i32) {
    %c0_i32 = arith.constant 0 : i32
    %c0_i32_0 = arith.constant 0 : i32
    %c0_i32_1 = arith.constant 0 : i32
    return %c0_i32, %c0_i32_0 : i32, i32
  }
  func.func @transform_7(%arg0: i32) -> (i32, i32) {
    %c0_i32 = arith.constant 0 : i32
    %c0_i32_0 = arith.constant 0 : i32
    %c0_i32_1 = arith.constant 0 : i32
    return %c0_i32, %c0_i32_0 : i32, i32
  }
}

</mosaic_0001>

<llo_original>
// kernel: conv3d_classifier_forward.1
$region0: #{conv3d_classifier_forward.1}
  #allocation0 [shape = 'u32[]', space=smem, size = 0x4, offset = 0x4, fixed_abs, tag = 'smem constant byte address 0x4 - core index']
  #allocation1 [shape = 'u32[144,128]{1,0:T(1,128)}', space=vmem, size = 0x12000, scoped, tag = 'internal scratch']
  #allocation2 [shape = 'f32[16,64]{1,0:T(8,128)}', space=vmem, size = 0x2000, scoped, tag = 'scratch operand']
  #allocation3 [shape = 'f32[8,32]{1,0:T(8,128)}', space=vmem, size = 0x1000, scoped, tag = 'scratch operand']
  #allocation4 [shape = 'f32[1,1]{1,0:T(1,128)S(1)}', space=vmem, size = 0x200, scoped, tag = 'scoped memory for conv3d_classifier_forward.1']
  %s0 = inlined_call_operand.vmem [shape: bf16[64,128], index: 0, kind: input, shape index: {}]
  %s1 = inlined_call_operand.vmem [shape: bf16[144,64], index: 1, kind: input, shape index: {}]
  %s2 = inlined_call_operand.vmem [shape: bf16[9,128,64], index: 2, kind: input, shape index: {}]
  %s3 = inlined_call_operand.vmem [shape: bf16[72,16], index: 3, kind: input, shape index: {}]
  %s4 = inlined_call_operand.vmem [shape: bf16[9,64,32], index: 4, kind: input, shape index: {}]
  %s5 = inlined_call_operand.vmem [shape: f32[32,2], index: 5, kind: input, shape index: {}]
  %s6 = inlined_call_operand.<no memory space> [shape: f32[1,1], index: 6, kind: input, shape index: {}]
  %s7 = inlined_call_operand.hbm [shape: f32[1,2], index: 7, kind: output, shape index: {}]
  %s8 = sld [smem:[#allocation0]]
  $region38: #{conv3d_classifier_forward.1} parent=0
    _
  %s10 = ssub.s32 1, %s8
  %s11 = scalar_select 0, %s10, %s8
  %v12 = vstv %s6
  %13 = vst [vmem:[#allocation4] sm:$0x1] %v12
  $region1: #{conv3d_classifier_forward.1} parent=0
    #allocation5 [shape = 'u8[512]{0}', space=vmem, size = 0x400, scoped, tag = 'output window, operand 0, single buffered']
    #allocation6 [shape = 's32[1]{0}', space=sflag, size = 0x4, scoped, tag = 'scoped memory for conv3d_classifier_forward.1']
    %14 = vsyncpa [#allocation6], 0
    // Predicated region
    $region2: #{conv3d_classifier_forward.1} parent=1 // pred_check
      _
    $region3: #{conv3d_classifier_forward.1} parent=1 // pred_check_branch
      %16 = sbr.rel (0) target = $region5
    $region4: #{conv3d_classifier_forward.1} parent=1 // pred_region
      _
    $region5: #{conv3d_classifier_forward.1} parent=1 // pred_fallthru
      _
    // Predicated region
    $region6: #{conv3d_classifier_forward.1} parent=1 // pred_check
      _
    $region7: #{conv3d_classifier_forward.1} parent=1 // pred_check_branch
      %18 = sbr.rel (0) target = $region9
    $region8: #{conv3d_classifier_forward.1} parent=1 // pred_region
      _
    $region9: #{conv3d_classifier_forward.1} parent=1 // pred_fallthru
      _
    // Predicated region
    $region10: #{conv3d_classifier_forward.1} parent=1 // pred_check
      _
    $region11: #{conv3d_classifier_forward.1} parent=1 // pred_check_branch
      %20 = sbr.rel (0) target = $region13
    $region12: #{conv3d_classifier_forward.1} parent=1 // pred_region
      _
    $region13: #{conv3d_classifier_forward.1} parent=1 // pred_fallthru
      _
    // Predicated region
    $region14: #{conv3d_classifier_forward.1} parent=1 // pred_check
      _
    $region15: #{conv3d_classifier_forward.1} parent=1 // pred_check_branch
      %22 = sbr.rel (0) target = $region17
    $region16: #{conv3d_classifier_forward.1} parent=1 // pred_region
      _
    $region17: #{conv3d_classifier_forward.1} parent=1 // pred_fallthru
      _
    // Predicated region
    $region18: #{conv3d_classifier_forward.1} parent=1 // pred_check
      _
    $region19: #{conv3d_classifier_forward.1} parent=1 // pred_check_branch
      %24 = sbr.rel (0) target = $region21
    $region20: #{conv3d_classifier_forward.1} parent=1 // pred_region
      _
    $region21: #{conv3d_classifier_forward.1} parent=1 // pred_fallthru
      _
    // Predicated region
    $region22: #{conv3d_classifier_forward.1} parent=1 // pred_check
      _
    $region23: #{conv3d_classifier_forward.1} parent=1 // pred_check_branch
      %26 = sbr.rel (0) target = $region25
    $region24: #{conv3d_classifier_forward.1} parent=1 // pred_region
      _
    $region25: #{conv3d_classifier_forward.1} parent=1 // pred_fallthru
      _
    // Predicated region
    $region26: #{conv3d_classifier_forward.1} parent=1 // pred_check
      _
    $region27: #{conv3d_classifier_forward.1} parent=1 // pred_check_branch
      %28 = sbr.rel (0) target = $region29
    $region28: #{conv3d_classifier_forward.1} parent=1 // pred_region
      _
    $region29: #{conv3d_classifier_forward.1} parent=1 // pred_fallthru
      _
    %v30 = vld [vmem:[%s0] sm:$0xf]
    %v31 = vld [vmem:[%s0 + $0x4] sm:$0xf]
    %v32 = vld [vmem:[%s0 + $0x8] sm:$0xf]
    %v33 = vld [vmem:[%s0 + $0xc] sm:$0xf]
    %v34 = vld [vmem:[%s0 + $0x10] sm:$0xf]
    %v35 = vld [vmem:[%s0 + $0x14] sm:$0xf]
    %v36 = vld [vmem:[%s0 + $0x18] sm:$0xf]
    %v37 = vld [vmem:[%s0 + $0x1c] sm:$0xf]
    %v38 = vld [vmem:[%s1] sm:$0xf]
    %v39 = vld [vmem:[%s1 + $0x4] sm:$0xf]
    %v40 = vld [vmem:[%s1 + $0x8] sm:$0xf]
    %v41 = vld [vmem:[%s1 + $0xc] sm:$0xf]
    %v42 = vld [vmem:[%s1 + $0x10] sm:$0xf]
    %v43 = vld [vmem:[%s1 + $0x14] sm:$0xf]
    %v44 = vld [vmem:[%s1 + $0x18] sm:$0xf]
    %v45 = vld [vmem:[%s1 + $0x1c] sm:$0xf]
    %v46 = vld [vmem:[%s1 + $0x20] sm:$0xf]
    %v47 = vld [vmem:[%s1 + $0x24] sm:$0xf]
    %v48 = vld [vmem:[%s1 + $0x28] sm:$0xf]
    %v49 = vld [vmem:[%s1 + $0x2c] sm:$0xf]
    %v50 = vld [vmem:[%s1 + $0x30] sm:$0xf]
    %v51 = vld [vmem:[%s1 + $0x34] sm:$0xf]
    %v52 = vld [vmem:[%s1 + $0x38] sm:$0xf]
    %v53 = vld [vmem:[%s1 + $0x3c] sm:$0xf]
    %v54 = vld [vmem:[%s1 + $0x40] sm:$0xf]
    %v55 = vld [vmem:[%s1 + $0x44] sm:$0xf]
    %v74 = vunpack.c.l.b16 %v38
    %v75 = vunpack.c.l.b16 %v39
    %v76 = vunpack.c.l.b16 %v40
    %v77 = vunpack.c.l.b16 %v41
    %v78 = vunpack.c.l.b16 %v42
    %v79 = vunpack.c.l.b16 %v43
    %v80 = vunpack.c.l.b16 %v44
    %v81 = vunpack.c.l.b16 %v45
    %v82 = vunpack.c.l.b16 %v46
    %v83 = vunpack.c.l.b16 %v47
    %v84 = vunpack.c.l.b16 %v48
    %v85 = vunpack.c.l.b16 %v49
    %v86 = vunpack.c.l.b16 %v50
    %v87 = vunpack.c.l.b16 %v51
    %v88 = vunpack.c.l.b16 %v52
    %v89 = vunpack.c.l.b16 %v53
    %v90 = vunpack.c.l.b16 %v54
    %v91 = vunpack.c.l.b16 %v55
    %v92 = vpack.c.b16 %v75, %v74
    %v93 = vpack.c.b16 %v77, %v76
    %v94 = vpack.c.b16 %v79, %v78
    %v95 = vpack.c.b16 %v81, %v80
    %v96 = vpack.c.b16 %v83, %v82
    %v97 = vpack.c.b16 %v85, %v84
    %v98 = vpack.c.b16 %v87, %v86
    %v99 = vpack.c.b16 %v89, %v88
    %v100 = vpack.c.b16 %v91, %v90
    %v109 = vunpack.c.l.b16 %v30
    %v110 = vunpack.c.l.b16 %v31
    %v111 = vunpack.c.l.b16 %v32
    %v112 = vunpack.c.l.b16 %v33
    %v113 = vunpack.c.l.b16 %v34
    %v114 = vunpack.c.l.b16 %v35
    %v115 = vunpack.c.l.b16 %v36
    %v116 = vunpack.c.l.b16 %v37
    %v117 = vpack.c.b16 %v110, %v109
    %v118 = vpack.c.b16 %v112, %v111
    %v119 = vpack.c.b16 %v114, %v113
    %v120 = vpack.c.b16 %v116, %v115
    %vm125 = vcmask 523264
    %v127 = vsel %vm125, %v92, 0
    %v130 = vsel %vm125, %v93, 0
    %v133 = vsel %vm125, %v94, 0
    %v136 = vsel %vm125, %v95, 0
    %v139 = vsel %vm125, %v96, 0
    %v142 = vsel %vm125, %v97, 0
    %v145 = vsel %vm125, %v98, 0
    %v148 = vsel %vm125, %v99, 0
    %v151 = vsel %vm125, %v100, 0
    %153 = vmatprep.subr.bf16.mxu0 0
    %154 = vmatpush1.bf16.msra.mxu0 %v117
    %155 = vmatprep.subr.bf16.mxu0 0
    %156 = vmatpush1.bf16.msra.mxu0 %v118
    %157 = vmatprep.subr.bf16.mxu0 0
    %158 = vmatpush1.bf16.msra.mxu0 %v119
    %159 = vmatprep.subr.bf16.mxu0 0
    %160 = vmatpush1.bf16.msra.mxu0 %v120
    %161 = vmatprep.subr.bf16.mxu0 0
    %162 = vmatpush1.bf16.msra.mxu0 0
    %163 = vmatprep.subr.bf16.mxu0 0
    %164 = vmatpush1.bf16.msra.mxu0 0
    %165 = vmatprep.subr.bf16.mxu0 0
    %166 = vmatpush1.bf16.msra.mxu0 0
    %167 = vmatprep.subr.bf16.mxu0 0
    %168 = vmatpush1.bf16.msra.mxu0 0
    %169 = vmatprep.subr.bf16.mxu0 0
    %170 = vmatpush1.bf16.msra.mxu0 0
    %171 = vmatprep.subr.bf16.mxu0 0
    %172 = vmatpush1.bf16.msra.mxu0 0
    %173 = vmatprep.subr.bf16.mxu0 0
    %174 = vmatpush1.bf16.msra.mxu0 0
    %175 = vmatprep.subr.bf16.mxu0 0
    %176 = vmatpush1.bf16.msra.mxu0 0
    %177 = vmatprep.subr.bf16.mxu0 0
    %178 = vmatpush1.bf16.msra.mxu0 0
    %179 = vmatprep.subr.bf16.mxu0 0
    %180 = vmatpush1.bf16.msra.mxu0 0
    %181 = vmatprep.subr.bf16.mxu0 0
    %182 = vmatpush1.bf16.msra.mxu0 0
    %183 = vmatprep.subr.bf16.mxu0 0
    %184 = vmatpush1.bf16.msra.mxu0 0
    %185 = vmatprep.mubr.bf16.mxu0 0
    %186 = vmatmul.mubr.bf16.gmra.mrb[0].mxu0 %v127
    %v187 = vpop.f32.mrb[0].mxu0
    %v188 = vadd.f32 0.0, %v187
    %v189 = vpop.f32.mrb[0].mxu0
    %v190 = vpop.f32.mrb[0].mxu0
    %v191 = vadd.f32 0.0, %v190
    %v192 = vpop.f32.mrb[0].mxu0
    %193 = vmatprep.mubr.bf16.mxu0 0
    %194 = vmatmul.mubr.bf16.gmra.mrb[0].mxu0 %v130
    %v195 = vpop.f32.mrb[0].mxu0
    %v196 = vadd.f32 0.0, %v195
    %v197 = vpop.f32.mrb[0].mxu0
    %v198 = vpop.f32.mrb[0].mxu0
    %v199 = vadd.f32 0.0, %v198
    %v200 = vpop.f32.mrb[0].mxu0
    %201 = vmatprep.mubr.bf16.mxu0 0
    %202 = vmatmul.mubr.bf16.gmra.mrb[0].mxu0 %v133
    %v203 = vpop.f32.mrb[0].mxu0
    %v204 = vadd.f32 0.0, %v203
    %v205 = vpop.f32.mrb[0].mxu0
    %v206 = vpop.f32.mrb[0].mxu0
    %v207 = vadd.f32 0.0, %v206
    %v208 = vpop.f32.mrb[0].mxu0
    %209 = vmatprep.mubr.bf16.mxu0 0
    %210 = vmatmul.mubr.bf16.gmra.mrb[0].mxu0 %v136
    %v211 = vpop.f32.mrb[0].mxu0
    %v212 = vadd.f32 0.0, %v211
    %v213 = vpop.f32.mrb[0].mxu0
    %v214 = vpop.f32.mrb[0].mxu0
    %v215 = vadd.f32 0.0, %v214
    %v216 = vpop.f32.mrb[0].mxu0
    %217 = vmatprep.mubr.bf16.mxu0 0
    %218 = vmatmul.mubr.bf16.gmra.mrb[0].mxu0 %v139
    %v219 = vpop.f32.mrb[0].mxu0
    %v220 = vadd.f32 0.0, %v219
    %v221 = vpop.f32.mrb[0].mxu0
    %v222 = vpop.f32.mrb[0].mxu0
    %v223 = vadd.f32 0.0, %v222
    %v224 = vpop.f32.mrb[0].mxu0
    %225 = vmatprep.mubr.bf16.mxu0 0
    %226 = vmatmul.mubr.bf16.gmra.mrb[0].mxu0 %v142
    %v227 = vpop.f32.mrb[0].mxu0
    %v228 = vadd.f32 0.0, %v227
    %v229 = vpop.f32.mrb[0].mxu0
    %v230 = vpop.f32.mrb[0].mxu0
    %v231 = vadd.f32 0.0, %v230
    %v232 = vpop.f32.mrb[0].mxu0
    %233 = vmatprep.mubr.bf16.mxu0 0
    %234 = vmatmul.mubr.bf16.gmra.mrb[0].mxu0 %v145
    %v235 = vpop.f32.mrb[0].mxu0
    %v236 = vadd.f32 0.0, %v235
    %v237 = vpop.f32.mrb[0].mxu0
    %v238 = vpop.f32.mrb[0].mxu0
    %v239 = vadd.f32 0.0, %v238
    %v240 = vpop.f32.mrb[0].mxu0
    %241 = vmatprep.mubr.bf16.mxu0 0
    %242 = vmatmul.mubr.bf16.gmra.mrb[0].mxu0 %v148
    %v243 = vpop.f32.mrb[0].mxu0
    %v244 = vadd.f32 0.0, %v243
    %v245 = vpop.f32.mrb[0].mxu0
    %v246 = vpop.f32.mrb[0].mxu0
    %v247 = vadd.f32 0.0, %v246
    %v248 = vpop.f32.mrb[0].mxu0
    %249 = vmatprep.mubr.bf16.mxu0 0
    %250 = vmatmul.mubr.bf16.gmra.mrb[0].mxu0 %v151
    %v251 = vpop.f32.mrb[0].mxu0
    %v252 = vadd.f32 0.0, %v251
    %v253 = vpop.f32.mrb[0].mxu0
    %v254 = vpop.f32.mrb[0].mxu0
    %v255 = vadd.f32 0.0, %v254
    %v256 = vpop.f32.mrb[0].mxu0
    %257 = vdwg.mxu0
    %v258 = vpack.c.bf16 %v191, %v188
    %v259 = vld [vmem:[%s2] sm:$0xf]
    %v260 = vld [vmem:[%s2 + $0x4] sm:$0xf]
    %v261 = vld [vmem:[%s2 + $0x8] sm:$0xf]
    %v262 = vld [vmem:[%s2 + $0xc] sm:$0xf]
    %v263 = vld [vmem:[%s2 + $0x10] sm:$0xf]
    %v264 = vld [vmem:[%s2 + $0x14] sm:$0xf]
    %v265 = vld [vmem:[%s2 + $0x18] sm:$0xf]
    %v266 = vld [vmem:[%s2 + $0x1c] sm:$0xf]
    %v267 = vld [vmem:[%s2 + $0x20] sm:$0xf]
    %v268 = vld [vmem:[%s2 + $0x24] sm:$0xf]
    %v269 = vld [vmem:[%s2 + $0x28] sm:$0xf]
    %v270 = vld [vmem:[%s2 + $0x2c] sm:$0xf]
    %v271 = vld [vmem:[%s2 + $0x30] sm:$0xf]
    %v272 = vld [vmem:[%s2 + $0x34] sm:$0xf]
    %v273 = vld [vmem:[%s2 + $0x38] sm:$0xf]
    %v274 = vld [vmem:[%s2 + $0x3c] sm:$0xf]
    %v291 = vunpack.c.l.b16 %v259
    %v292 = vunpack.c.l.b16 %v260
    %v293 = vunpack.c.l.b16 %v261
    %v294 = vunpack.c.l.b16 %v262
    %v295 = vunpack.c.l.b16 %v263
    %v296 = vunpack.c.l.b16 %v264
    %v297 = vunpack.c.l.b16 %v265
    %v298 = vunpack.c.l.b16 %v266
    %v299 = vunpack.c.l.b16 %v267
    %v300 = vunpack.c.l.b16 %v268
    %v301 = vunpack.c.l.b16 %v269
    %v302 = vunpack.c.l.b16 %v270
    %v303 = vunpack.c.l.b16 %v271
    %v304 = vunpack.c.l.b16 %v272
    %v305 = vunpack.c.l.b16 %v273
    %v306 = vunpack.c.l.b16 %v274
    %v307 = vpack.c.b16 %v292, %v291
    %v308 = vpack.c.b16 %v294, %v293
    %v309 = vpack.c.b16 %v296, %v295
    %v310 = vpack.c.b16 %v298, %v297
    %v311 = vpack.c.b16 %v300, %v299
    %v312 = vpack.c.b16 %v302, %v301
    %v313 = vpack.c.b16 %v304, %v303
    %v314 = vpack.c.b16 %v306, %v305
    %323 = vmatprep.subr.bf16.mxu0 0
    %324 = vmatpush1.bf16.msra.mxu0 %v307
    %325 = vmatprep.subr.bf16.mxu0 0
    %326 = vmatpush1.bf16.msra.mxu0 %v308
    %327 = vmatprep.subr.bf16.mxu0 0
    %328 = vmatpush1.bf16.msra.mxu0 %v309
    %329 = vmatprep.subr.bf16.mxu0 0
    %330 = vmatpush1.bf16.msra.mxu0 %v310
    %331 = vmatprep.subr.bf16.mxu0 0
    %332 = vmatpush1.bf16.msra.mxu0 %v311
    %333 = vmatprep.subr.bf16.mxu0 0
    %334 = vmatpush1.bf16.msra.mxu0 %v312
    %335 = vmatprep.subr.bf16.mxu0 0
    %336 = vmatpush1.bf16.msra.mxu0 %v313
    %337 = vmatprep.subr.bf16.mxu0 0
    %338 = vmatpush1.bf16.msra.mxu0 %v314
    %339 = vmatprep.subr.bf16.mxu0 0
    %340 = vmatpush1.bf16.msra.mxu0 0
    %341 = vmatprep.subr.bf16.mxu0 0
    %342 = vmatpush1.bf16.msra.mxu0 0
    %343 = vmatprep.subr.bf16.mxu0 0
    %344 = vmatpush1.bf16.msra.mxu0 0
    %345 = vmatprep.subr.bf16.mxu0 0
    %346 = vmatpush1.bf16.msra.mxu0 0
    %347 = vmatprep.subr.bf16.mxu0 0
    %348 = vmatpush1.bf16.msra.mxu0 0
    %349 = vmatprep.subr.bf16.mxu0 0
    %350 = vmatpush1.bf16.msra.mxu0 0
    %351 = vmatprep.subr.bf16.mxu0 0
    %352 = vmatpush1.bf16.msra.mxu0 0
    %353 = vmatprep.subr.bf16.mxu0 0
    %354 = vmatpush1.bf16.msra.mxu0 0
    %355 = vmatprep.mubr.bf16.mxu0 0
    %356 = vmatmul.mubr.bf16.gmra.mrb[0].mxu0 %v258
    %v357 = vpop.f32.mrb[0].mxu0
    %v358 = vadd.f32 0.0, %v357
    %v359 = vpop.f32.mrb[0].mxu0
    %v360 = vpop.f32.mrb[0].mxu0
    %v361 = vadd.f32 0.0, %v360
    %v362 = vpop.f32.mrb[0].mxu0
    %363 = vdwg.mxu0
    %364 = vst.msk [vmem:[#allocation2] sm:$0xff] %vm125, %v358
    %365 = vst.msk [vmem:[#allocation2 + $0x8] sm:$0xff] %vm125, %v361
    %v366 = vpack.c.bf16 %v199, %v196
    %s367 = scalar_lea.vmem %s2, 64
    %v368 = vld [vmem:[%s367] sm:$0xf]
    %v369 = vld [vmem:[%s367 + $0x4] sm:$0xf]
    %v370 = vld [vmem:[%s367 + $0x8] sm:$0xf]
    %v371 = vld [vmem:[%s367 + $0xc] sm:$0xf]
    %v372 = vld [vmem:[%s367 + $0x10] sm:$0xf]
    %v373 = vld [vmem:[%s367 + $0x14] sm:$0xf]
    %v374 = vld [vmem:[%s367 + $0x18] sm:$0xf]
    %v375 = vld [vmem:[%s367 + $0x1c] sm:$0xf]
    %v376 = vld [vmem:[%s367 + $0x20] sm:$0xf]
    %v377 = vld [vmem:[%s367 + $0x24] sm:$0xf]
    %v378 = vld [vmem:[%s367 + $0x28] sm:$0xf]
    %v379 = vld [vmem:[%s367 + $0x2c] sm:$0xf]
    %v380 = vld [vmem:[%s367 + $0x30] sm:$0xf]
    %v381 = vld [vmem:[%s367 + $0x34] sm:$0xf]
    %v382 = vld [vmem:[%s367 + $0x38] sm:$0xf]
    %v383 = vld [vmem:[%s367 + $0x3c] sm:$0xf]
    %v400 = vunpack.c.l.b16 %v368
    %v401 = vunpack.c.l.b16 %v369
    %v402 = vunpack.c.l.b16 %v370
    %v403 = vunpack.c.l.b16 %v371
    %v404 = vunpack.c.l.b16 %v372
    %v405 = vunpack.c.l.b16 %v373
    %v406 = vunpack.c.l.b16 %v374
    %v407 = vunpack.c.l.b16 %v375
    %v408 = vunpack.c.l.b16 %v376
    %v409 = vunpack.c.l.b16 %v377
    %v410 = vunpack.c.l.b16 %v378
    %v411 = vunpack.c.l.b16 %v379
    %v412 = vunpack.c.l.b16 %v380
    %v413 = vunpack.c.l.b16 %v381
    %v414 = vunpack.c.l.b16 %v382
    %v415 = vunpack.c.l.b16 %v383
    %v416 = vpack.c.b16 %v401, %v400
    %v417 = vpack.c.b16 %v403, %v402
    %v418 = vpack.c.b16 %v405, %v404
    %v419 = vpack.c.b16 %v407, %v406
    %v420 = vpack.c.b16 %v409, %v408
    %v421 = vpack.c.b16 %v411, %v410
    %v422 = vpack.c.b16 %v413, %v412
    %v423 = vpack.c.b16 %v415, %v414
    %432 = vmatprep.subr.bf16.mxu0 0
    %433 = vmatpush1.bf16.msra.mxu0 %v416
    %434 = vmatprep.subr.bf16.mxu0 0
    %435 = vmatpush1.bf16.msra.mxu0 %v417
    %436 = vmatprep.subr.bf16.mxu0 0
    %437 = vmatpush1.bf16.msra.mxu0 %v418
    %438 = vmatprep.subr.bf16.mxu0 0
    %439 = vmatpush1.bf16.msra.mxu0 %v419
    %440 = vmatprep.subr.bf16.mxu0 0
    %441 = vmatpush1.bf16.msra.mxu0 %v420
    %442 = vmatprep.subr.bf16.mxu0 0
    %443 = vmatpush1.bf16.msra.mxu0 %v421
    %444 = vmatprep.subr.bf16.mxu0 0
    %445 = vmatpush1.bf16.msra.mxu0 %v422
    %446 = vmatprep.subr.bf16.mxu0 0
    %447 = vmatpush1.bf16.msra.mxu0 %v423
    %448 = vmatprep.subr.bf16.mxu0 0
    %449 = vmatpush1.bf16.msra.mxu0 0
    %450 = vmatprep.subr.bf16.mxu0 0
    %451 = vmatpush1.bf16.msra.mxu0 0
    %452 = vmatprep.subr.bf16.mxu0 0
    %453 = vmatpush1.bf16.msra.mxu0 0
    %454 = vmatprep.subr.bf16.mxu0 0
    %455 = vmatpush1.bf16.msra.mxu0 0
    %456 = vmatprep.subr.bf16.mxu0 0
    %457 = vmatpush1.bf16.msra.mxu0 0
    %458 = vmatprep.subr.bf16.mxu0 0
    %459 = vmatpush1.bf16.msra.mxu0 0
    %460 = vmatprep.subr.bf16.mxu0 0
    %461 = vmatpush1.bf16.msra.mxu0 0
    %462 = vmatprep.subr.bf16.mxu0 0
    %463 = vmatpush1.bf16.msra.mxu0 0
    %464 = vmatprep.mubr.bf16.mxu0 0
    %465 = vmatmul.mubr.bf16.gmra.mrb[0].mxu0 %v366
    %v466 = vpop.f32.mrb[0].mxu0
    %v467 = vadd.f32 0.0, %v466
    %v468 = vpop.f32.mrb[0].mxu0
    %v469 = vpop.f32.mrb[0].mxu0
    %v470 = vadd.f32 0.0, %v469
    %v471 = vpop.f32.mrb[0].mxu0
    %472 = vdwg.mxu0
    %v473 = vld [vmem:[#allocation2] sm:$0xff]
    %v474 = vld [vmem:[#allocation2 + $0x8] sm:$0xff]
    %v475 = vadd.f32 %v473, %v467
    %v476 = vadd.f32 %v474, %v470
    %477 = vst.msk [vmem:[#allocation2] sm:$0xff] %vm125, %v475
    %478 = vst.msk [vmem:[#allocation2 + $0x8] sm:$0xff] %vm125, %v476
    %v479 = vpack.c.bf16 %v207, %v204
    %s480 = scalar_lea.vmem %s2, 128
    %v481 = vld [vmem:[%s480] sm:$0xf]
    %v482 = vld [vmem:[%s480 + $0x4] sm:$0xf]
    %v483 = vld [vmem:[%s480 + $0x8] sm:$0xf]
    %v484 = vld [vmem:[%s480 + $0xc] sm:$0xf]
    %v485 = vld [vmem:[%s480 + $0x10] sm:$0xf]
    %v486 = vld [vmem:[%s480 + $0x14] sm:$0xf]
    %v487 = vld [vmem:[%s480 + $0x18] sm:$0xf]
    %v488 = vld [vmem:[%s480 + $0x1c] sm:$0xf]
    %v489 = vld [vmem:[%s480 + $0x20] sm:$0xf]
    %v490 = vld [vmem:[%s480 + $0x24] sm:$0xf]
    %v491 = vld [vmem:[%s480 + $0x28] sm:$0xf]
    %v492 = vld [vmem:[%s480 + $0x2c] sm:$0xf]
    %v493 = vld [vmem:[%s480 + $0x30] sm:$0xf]
    %v494 = vld [vmem:[%s480 + $0x34] sm:$0xf]
    %v495 = vld [vmem:[%s480 + $0x38] sm:$0xf]
    %v496 = vld [vmem:[%s480 + $0x3c] sm:$0xf]
    %v513 = vunpack.c.l.b16 %v481
    %v514 = vunpack.c.l.b16 %v482
    %v515 = vunpack.c.l.b16 %v483
    %v516 = vunpack.c.l.b16 %v484
    %v517 = vunpack.c.l.b16 %v485
    %v518 = vunpack.c.l.b16 %v486
    %v519 = vunpack.c.l.b16 %v487
    %v520 = vunpack.c.l.b16 %v488
    %v521 = vunpack.c.l.b16 %v489
    %v522 = vunpack.c.l.b16 %v490
    %v523 = vunpack.c.l.b16 %v491
    %v524 = vunpack.c.l.b16 %v492
    %v525 = vunpack.c.l.b16 %v493
    %v526 = vunpack.c.l.b16 %v494
    %v527 = vunpack.c.l.b16 %v495
    %v528 = vunpack.c.l.b16 %v496
    %v529 = vpack.c.b16 %v514, %v513
    %v530 = vpack.c.b16 %v516, %v515
    %v531 = vpack.c.b16 %v518, %v517
    %v532 = vpack.c.b16 %v520, %v519
    %v533 = vpack.c.b16 %v522, %v521
    %v534 = vpack.c.b16 %v524, %v523
    %v535 = vpack.c.b16 %v526, %v525
    %v536 = vpack.c.b16 %v528, %v527
    %545 = vmatprep.subr.bf16.mxu0 0
    %546 = vmatpush1.bf16.msra.mxu0 %v529
    %547 = vmatprep.subr.bf16.mxu0 0
    %548 = vmatpush1.bf16.msra.mxu0 %v530
    %549 = vmatprep.subr.bf16.mxu0 0
    %550 = vmatpush1.bf16.msra.mxu0 %v531
    %551 = vmatprep.subr.bf16.mxu0 0
    %552 = vmatpush1.bf16.msra.mxu0 %v532
    %553 = vmatprep.subr.bf16.mxu0 0
    %554 = vmatpush1.bf16.msra.mxu0 %v533
    %555 = vmatprep.subr.bf16.mxu0 0
    %556 = vmatpush1.bf16.msra.mxu0 %v534
    %557 = vmatprep.subr.bf16.mxu0 0
    %558 = vmatpush1.bf16.msra.mxu0 %v535
    %559 = vmatprep.subr.bf16.mxu0 0
    %560 = vmatpush1.bf16.msra.mxu0 %v536
    %561 = vmatprep.subr.bf16.mxu0 0
    %562 = vmatpush1.bf16.msra.mxu0 0
    %563 = vmatprep.subr.bf16.mxu0 0
    %564 = vmatpush1.bf16.msra.mxu0 0
    %565 = vmatprep.subr.bf16.mxu0 0
    %566 = vmatpush1.bf16.msra.mxu0 0
    %567 = vmatprep.subr.bf16.mxu0 0
    %568 = vmatpush1.bf16.msra.mxu0 0
    %569 = vmatprep.subr.bf16.mxu0 0
    %570 = vmatpush1.bf16.msra.mxu0 0
    %571 = vmatprep.subr.bf16.mxu0 0
    %572 = vmatpush1.bf16.msra.mxu0 0
    %573 = vmatprep.subr.bf16.mxu0 0
    %574 = vmatpush1.bf16.msra.mxu0 0
    %575 = vmatprep.subr.bf16.mxu0 0
    %576 = vmatpush1.bf16.msra.mxu0 0
    %577 = vmatprep.mubr.bf16.mxu0 0
    %578 = vmatmul.mubr.bf16.gmra.mrb[0].mxu0 %v479
    %v579 = vpop.f32.mrb[0].mxu0
    %v580 = vadd.f32 0.0, %v579
    %v581 = vpop.f32.mrb[0].mxu0
    %v582 = vpop.f32.mrb[0].mxu0
    %v583 = vadd.f32 0.0, %v582
    %v584 = vpop.f32.mrb[0].mxu0
    %585 = vdwg.mxu0
    %v586 = vld [vmem:[#allocation2] sm:$0xff]
    %v587 = vld [vmem:[#allocation2 + $0x8] sm:$0xff]
    %v588 = vadd.f32 %v586, %v580
    %v589 = vadd.f32 %v587, %v583
    %590 = vst.msk [vmem:[#allocation2] sm:$0xff] %vm125, %v588
    %591 = vst.msk [vmem:[#allocation2 + $0x8] sm:$0xff] %vm125, %v589
    %v592 = vpack.c.bf16 %v215, %v212
    %s593 = scalar_lea.vmem %s2, 192
    %v594 = vld [vmem:[%s593] sm:$0xf]
    %v595 = vld [vmem:[%s593 + $0x4] sm:$0xf]
    %v596 = vld [vmem:[%s593 + $0x8] sm:$0xf]
    %v597 = vld [vmem:[%s593 + $0xc] sm:$0xf]
    %v598 = vld [vmem:[%s593 + $0x10] sm:$0xf]
    %v599 = vld [vmem:[%s593 + $0x14] sm:$0xf]
    %v600 = vld [vmem:[%s593 + $0x18] sm:$0xf]
    %v601 = vld [vmem:[%s593 + $0x1c] sm:$0xf]
    %v602 = vld [vmem:[%s593 + $0x20] sm:$0xf]
    %v603 = vld [vmem:[%s593 + $0x24] sm:$0xf]
    %v604 = vld [vmem:[%s593 + $0x28] sm:$0xf]
    %v605 = vld [vmem:[%s593 + $0x2c] sm:$0xf]
    %v606 = vld [vmem:[%s593 + $0x30] sm:$0xf]
    %v607 = vld [vmem:[%s593 + $0x34] sm:$0xf]
    %v608 = vld [vmem:[%s593 + $0x38] sm:$0xf]
    %v609 = vld [vmem:[%s593 + $0x3c] sm:$0xf]
    %v626 = vunpack.c.l.b16 %v594
    %v627 = vunpack.c.l.b16 %v595
    %v628 = vunpack.c.l.b16 %v596
    %v629 = vunpack.c.l.b16 %v597
    %v630 = vunpack.c.l.b16 %v598
    %v631 = vunpack.c.l.b16 %v599
    %v632 = vunpack.c.l.b16 %v600
    %v633 = vunpack.c.l.b16 %v601
    %v634 = vunpack.c.l.b16 %v602
    %v635 = vunpack.c.l.b16 %v603
    %v636 = vunpack.c.l.b16 %v604
    %v637 = vunpack.c.l.b16 %v605
    %v638 = vunpack.c.l.b16 %v606
    %v639 = vunpack.c.l.b16 %v607
    %v640 = vunpack.c.l.b16 %v608
    %v641 = vunpack.c.l.b16 %v609
    %v642 = vpack.c.b16 %v627, %v626
    %v643 = vpack.c.b16 %v629, %v628
    %v644 = vpack.c.b16 %v631, %v630
    %v645 = vpack.c.b16 %v633, %v632
    %v646 = vpack.c.b16 %v635, %v634
    %v647 = vpack.c.b16 %v637, %v636
    %v648 = vpack.c.b16 %v639, %v638
    %v649 = vpack.c.b16 %v641, %v640
    %658 = vmatprep.subr.bf16.mxu0 0
    %659 = vmatpush1.bf16.msra.mxu0 %v642
    %660 = vmatprep.subr.bf16.mxu0 0
    %661 = vmatpush1.bf16.msra.mxu0 %v643
    %662 = vmatprep.subr.bf16.mxu0 0
    %663 = vmatpush1.bf16.msra.mxu0 %v644
    %664 = vmatprep.subr.bf16.mxu0 0
    %665 = vmatpush1.bf16.msra.mxu0 %v645
    %666 = vmatprep.subr.bf16.mxu0 0
    %667 = vmatpush1.bf16.msra.mxu0 %v646
    %668 = vmatprep.subr.bf16.mxu0 0
    %669 = vmatpush1.bf16.msra.mxu0 %v647
    %670 = vmatprep.subr.bf16.mxu0 0
    %671 = vmatpush1.bf16.msra.mxu0 %v648
    %672 = vmatprep.subr.bf16.mxu0 0
    %673 = vmatpush1.bf16.msra.mxu0 %v649
    %674 = vmatprep.subr.bf16.mxu0 0
    %675 = vmatpush1.bf16.msra.mxu0 0
    %676 = vmatprep.subr.bf16.mxu0 0
    %677 = vmatpush1.bf16.msra.mxu0 0
    %678 = vmatprep.subr.bf16.mxu0 0
    %679 = vmatpush1.bf16.msra.mxu0 0
    %680 = vmatprep.subr.bf16.mxu0 0
    %681 = vmatpush1.bf16.msra.mxu0 0
    %682 = vmatprep.subr.bf16.mxu0 0
    %683 = vmatpush1.bf16.msra.mxu0 0
    %684 = vmatprep.subr.bf16.mxu0 0
    %685 = vmatpush1.bf16.msra.mxu0 0
    %686 = vmatprep.subr.bf16.mxu0 0
    %687 = vmatpush1.bf16.msra.mxu0 0
    %688 = vmatprep.subr.bf16.mxu0 0
    %689 = vmatpush1.bf16.msra.mxu0 0
    %690 = vmatprep.mubr.bf16.mxu0 0
    %691 = vmatmul.mubr.bf16.gmra.mrb[0].mxu0 %v592
    %v692 = vpop.f32.mrb[0].mxu0
    %v693 = vadd.f32 0.0, %v692
    %v694 = vpop.f32.mrb[0].mxu0
    %v695 = vpop.f32.mrb[0].mxu0
    %v696 = vadd.f32 0.0, %v695
    %v697 = vpop.f32.mrb[0].mxu0
    %698 = vdwg.mxu0
    %v699 = vld [vmem:[#allocation2] sm:$0xff]
    %v700 = vld [vmem:[#allocation2 + $0x8] sm:$0xff]
    %v701 = vadd.f32 %v699, %v693
    %v702 = vadd.f32 %v700, %v696
    %703 = vst.msk [vmem:[#allocation2] sm:$0xff] %vm125, %v701
    %704 = vst.msk [vmem:[#allocation2 + $0x8] sm:$0xff] %vm125, %v702
    %v705 = vpack.c.bf16 %v223, %v220
    %s706 = scalar_lea.vmem %s2, 256
    %v707 = vld [vmem:[%s706] sm:$0xf]
    %v708 = vld [vmem:[%s706 + $0x4] sm:$0xf]
    %v709 = vld [vmem:[%s706 + $0x8] sm:$0xf]
    %v710 = vld [vmem:[%s706 + $0xc] sm:$0xf]
    %v711 = vld [vmem:[%s706 + $0x10] sm:$0xf]
    %v712 = vld [vmem:[%s706 + $0x14] sm:$0xf]
    %v713 = vld [vmem:[%s706 + $0x18] sm:$0xf]
    %v714 = vld [vmem:[%s706 + $0x1c] sm:$0xf]
    %v715 = vld [vmem:[%s706 + $0x20] sm:$0xf]
    %v716 = vld [vmem:[%s706 + $0x24] sm:$0xf]
    %v717 = vld [vmem:[%s706 + $0x28] sm:$0xf]
    %v718 = vld [vmem:[%s706 + $0x2c] sm:$0xf]
    %v719 = vld [vmem:[%s706 + $0x30] sm:$0xf]
    %v720 = vld [vmem:[%s706 + $0x34] sm:$0xf]
    %v721 = vld [vmem:[%s706 + $0x38] sm:$0xf]
    %v722 = vld [vmem:[%s706 + $0x3c] sm:$0xf]
    %v739 = vunpack.c.l.b16 %v707
    %v740 = vunpack.c.l.b16 %v708
    %v741 = vunpack.c.l.b16 %v709
    %v742 = vunpack.c.l.b16 %v710
    %v743 = vunpack.c.l.b16 %v711
    %v744 = vunpack.c.l.b16 %v712
    %v745 = vunpack.c.l.b16 %v713
    %v746 = vunpack.c.l.b16 %v714
    %v747 = vunpack.c.l.b16 %v715
    %v748 = vunpack.c.l.b16 %v716
    %v749 = vunpack.c.l.b16 %v717
    %v750 = vunpack.c.l.b16 %v718
    %v751 = vunpack.c.l.b16 %v719
    %v752 = vunpack.c.l.b16 %v720
    %v753 = vunpack.c.l.b16 %v721
    %v754 = vunpack.c.l.b16 %v722
    %v755 = vpack.c.b16 %v740, %v739
    %v756 = vpack.c.b16 %v742, %v741
    %v757 = vpack.c.b16 %v744, %v743
    %v758 = vpack.c.b16 %v746, %v745
    %v759 = vpack.c.b16 %v748, %v747
    %v760 = vpack.c.b16 %v750, %v749
    %v761 = vpack.c.b16 %v752, %v751
    %v762 = vpack.c.b16 %v754, %v753
    %771 = vmatprep.subr.bf16.mxu0 0
    %772 = vmatpush1.bf16.msra.mxu0 %v755
    %773 = vmatprep.subr.bf16.mxu0 0
    %774 = vmatpush1.bf16.msra.mxu0 %v756
    %775 = vmatprep.subr.bf16.mxu0 0
    %776 = vmatpush1.bf16.msra.mxu0 %v757
    %777 = vmatprep.subr.bf16.mxu0 0
    %778 = vmatpush1.bf16.msra.mxu0 %v758
    %779 = vmatprep.subr.bf16.mxu0 0
    %780 = vmatpush1.bf16.msra.mxu0 %v759
    %781 = vmatprep.subr.bf16.mxu0 0
    %782 = vmatpush1.bf16.msra.mxu0 %v760
    %783 = vmatprep.subr.bf16.mxu0 0
    %784 = vmatpush1.bf16.msra.mxu0 %v761
    %785 = vmatprep.subr.bf16.mxu0 0
    %786 = vmatpush1.bf16.msra.mxu0 %v762
    %787 = vmatprep.subr.bf16.mxu0 0
    %788 = vmatpush1.bf16.msra.mxu0 0
    %789 = vmatprep.subr.bf16.mxu0 0
    %790 = vmatpush1.bf16.msra.mxu0 0
    %791 = vmatprep.subr.bf16.mxu0 0
    %792 = vmatpush1.bf16.msra.mxu0 0
    %793 = vmatprep.subr.bf16.mxu0 0
    %794 = vmatpush1.bf16.msra.mxu0 0
    %795 = vmatprep.subr.bf16.mxu0 0
    %796 = vmatpush1.bf16.msra.mxu0 0
    %797 = vmatprep.subr.bf16.mxu0 0
    %798 = vmatpush1.bf16.msra.mxu0 0
    %799 = vmatprep.subr.bf16.mxu0 0
    %800 = vmatpush1.bf16.msra.mxu0 0
    %801 = vmatprep.subr.bf16.mxu0 0
    %802 = vmatpush1.bf16.msra.mxu0 0
    %803 = vmatprep.mubr.bf16.mxu0 0
    %804 = vmatmul.mubr.bf16.gmra.mrb[0].mxu0 %v705
    %v805 = vpop.f32.mrb[0].mxu0
    %v806 = vadd.f32 0.0, %v805
    %v807 = vpop.f32.mrb[0].mxu0
    %v808 = vpop.f32.mrb[0].mxu0
    %v809 = vadd.f32 0.0, %v808
    %v810 = vpop.f32.mrb[0].mxu0
    %811 = vdwg.mxu0
    %v812 = vld [vmem:[#allocation2] sm:$0xff]
    %v813 = vld [vmem:[#allocation2 + $0x8] sm:$0xff]
    %v814 = vadd.f32 %v812, %v806
    %v815 = vadd.f32 %v813, %v809
    %816 = vst.msk [vmem:[#allocation2] sm:$0xff] %vm125, %v814
    %817 = vst.msk [vmem:[#allocation2 + $0x8] sm:$0xff] %vm125, %v815
    %v818 = vpack.c.bf16 %v231, %v228
    %s819 = scalar_lea.vmem %s2, 320
    %v820 = vld [vmem:[%s819] sm:$0xf]
    %v821 = vld [vmem:[%s819 + $0x4] sm:$0xf]
    %v822 = vld [vmem:[%s819 + $0x8] sm:$0xf]
    %v823 = vld [vmem:[%s819 + $0xc] sm:$0xf]
    %v824 = vld [vmem:[%s819 + $0x10] sm:$0xf]
    %v825 = vld [vmem:[%s819 + $0x14] sm:$0xf]
    %v826 = vld [vmem:[%s819 + $0x18] sm:$0xf]
    %v827 = vld [vmem:[%s819 + $0x1c] sm:$0xf]
    %v828 = vld [vmem:[%s819 + $0x20] sm:$0xf]
    %v829 = vld [vmem:[%s819 + $0x24] sm:$0xf]
    %v830 = vld [vmem:[%s819 + $0x28] sm:$0xf]
    %v831 = vld [vmem:[%s819 + $0x2c] sm:$0xf]
    %v832 = vld [vmem:[%s819 + $0x30] sm:$0xf]
    %v833 = vld [vmem:[%s819 + $0x34] sm:$0xf]
    %v834 = vld [vmem:[%s819 + $0x38] sm:$0xf]
    %v835 = vld [vmem:[%s819 + $0x3c] sm:$0xf]
    %v852 = vunpack.c.l.b16 %v820
    %v853 = vunpack.c.l.b16 %v821
    %v854 = vunpack.c.l.b16 %v822
    %v855 = vunpack.c.l.b16 %v823
    %v856 = vunpack.c.l.b16 %v824
    %v857 = vunpack.c.l.b16 %v825
    %v858 = vunpack.c.l.b16 %v826
    %v859 = vunpack.c.l.b16 %v827
    %v860 = vunpack.c.l.b16 %v828
    %v861 = vunpack.c.l.b16 %v829
    %v862 = vunpack.c.l.b16 %v830
    %v863 = vunpack.c.l.b16 %v831
    %v864 = vunpack.c.l.b16 %v832
    %v865 = vunpack.c.l.b16 %v833
    %v866 = vunpack.c.l.b16 %v834
    %v867 = vunpack.c.l.b16 %v835
    %v868 = vpack.c.b16 %v853, %v852
    %v869 = vpack.c.b16 %v855, %v854
    %v870 = vpack.c.b16 %v857, %v856
    %v871 = vpack.c.b16 %v859, %v858
    %v872 = vpack.c.b16 %v861, %v860
    %v873 = vpack.c.b16 %v863, %v862
    %v874 = vpack.c.b16 %v865, %v864
    %v875 = vpack.c.b16 %v867, %v866
    %884 = vmatprep.subr.bf16.mxu0 0
    %885 = vmatpush1.bf16.msra.mxu0 %v868
    %886 = vmatprep.subr.bf16.mxu0 0
    %887 = vmatpush1.bf16.msra.mxu0 %v869
    %888 = vmatprep.subr.bf16.mxu0 0
    %889 = vmatpush1.bf16.msra.mxu0 %v870
    %890 = vmatprep.subr.bf16.mxu0 0
    %891 = vmatpush1.bf16.msra.mxu0 %v871
    %892 = vmatprep.subr.bf16.mxu0 0
    %893 = vmatpush1.bf16.msra.mxu0 %v872
    %894 = vmatprep.subr.bf16.mxu0 0
    %895 = vmatpush1.bf16.msra.mxu0 %v873
    %896 = vmatprep.subr.bf16.mxu0 0
    %897 = vmatpush1.bf16.msra.mxu0 %v874
    %898 = vmatprep.subr.bf16.mxu0 0
    %899 = vmatpush1.bf16.msra.mxu0 %v875
    %900 = vmatprep.subr.bf16.mxu0 0
    %901 = vmatpush1.bf16.msra.mxu0 0
    %902 = vmatprep.subr.bf16.mxu0 0
    %903 = vmatpush1.bf16.msra.mxu0 0
    %904 = vmatprep.subr.bf16.mxu0 0
    %905 = vmatpush1.bf16.msra.mxu0 0
    %906 = vmatprep.subr.bf16.mxu0 0
    %907 = vmatpush1.bf16.msra.mxu0 0
    %908 = vmatprep.subr.bf16.mxu0 0
    %909 = vmatpush1.bf16.msra.mxu0 0
    %910 = vmatprep.subr.bf16.mxu0 0
    %911 = vmatpush1.bf16.msra.mxu0 0
    %912 = vmatprep.subr.bf16.mxu0 0
    %913 = vmatpush1.bf16.msra.mxu0 0
    %914 = vmatprep.subr.bf16.mxu0 0
    %915 = vmatpush1.bf16.msra.mxu0 0
    %916 = vmatprep.mubr.bf16.mxu0 0
    %917 = vmatmul.mubr.bf16.gmra.mrb[0].mxu0 %v818
    %v918 = vpop.f32.mrb[0].mxu0
    %v919 = vadd.f32 0.0, %v918
    %v920 = vpop.f32.mrb[0].mxu0
    %v921 = vpop.f32.mrb[0].mxu0
    %v922 = vadd.f32 0.0, %v921
    %v923 = vpop.f32.mrb[0].mxu0
    %924 = vdwg.mxu0
    %v925 = vld [vmem:[#allocation2] sm:$0xff]
    %v926 = vld [vmem:[#allocation2 + $0x8] sm:$0xff]
    %v927 = vadd.f32 %v925, %v919
    %v928 = vadd.f32 %v926, %v922
    %929 = vst.msk [vmem:[#allocation2] sm:$0xff] %vm125, %v927
    %930 = vst.msk [vmem:[#allocation2 + $0x8] sm:$0xff] %vm125, %v928
    %v931 = vpack.c.bf16 %v239, %v236
    %s932 = scalar_lea.vmem %s2, 384
    %v933 = vld [vmem:[%s932] sm:$0xf]
    %v934 = vld [vmem:[%s932 + $0x4] sm:$0xf]
    %v935 = vld [vmem:[%s932 + $0x8] sm:$0xf]
    %v936 = vld [vmem:[%s932 + $0xc] sm:$0xf]
    %v937 = vld [vmem:[%s932 + $0x10] sm:$0xf]
    %v938 = vld [vmem:[%s932 + $0x14] sm:$0xf]
    %v939 = vld [vmem:[%s932 + $0x18] sm:$0xf]
    %v940 = vld [vmem:[%s932 + $0x1c] sm:$0xf]
    %v941 = vld [vmem:[%s932 + $0x20] sm:$0xf]
    %v942 = vld [vmem:[%s932 + $0x24] sm:$0xf]
    %v943 = vld [vmem:[%s932 + $0x28] sm:$0xf]
    %v944 = vld [vmem:[%s932 + $0x2c] sm:$0xf]
    %v945 = vld [vmem:[%s932 + $0x30] sm:$0xf]
    %v946 = vld [vmem:[%s932 + $0x34] sm:$0xf]
    %v947 = vld [vmem:[%s932 + $0x38] sm:$0xf]
    %v948 = vld [vmem:[%s932 + $0x3c] sm:$0xf]
    %v965 = vunpack.c.l.b16 %v933
    %v966 = vunpack.c.l.b16 %v934
    %v967 = vunpack.c.l.b16 %v935
    %v968 = vunpack.c.l.b16 %v936
    %v969 = vunpack.c.l.b16 %v937
    %v970 = vunpack.c.l.b16 %v938
    %v971 = vunpack.c.l.b16 %v939
    %v972 = vunpack.c.l.b16 %v940
    %v973 = vunpack.c.l.b16 %v941
    %v974 = vunpack.c.l.b16 %v942
    %v975 = vunpack.c.l.b16 %v943
    %v976 = vunpack.c.l.b16 %v944
    %v977 = vunpack.c.l.b16 %v945
    %v978 = vunpack.c.l.b16 %v946
    %v979 = vunpack.c.l.b16 %v947
    %v980 = vunpack.c.l.b16 %v948
    %v981 = vpack.c.b16 %v966, %v965
    %v982 = vpack.c.b16 %v968, %v967
    %v983 = vpack.c.b16 %v970, %v969
    %v984 = vpack.c.b16 %v972, %v971
    %v985 = vpack.c.b16 %v974, %v973
    %v986 = vpack.c.b16 %v976, %v975
    %v987 = vpack.c.b16 %v978, %v977
    %v988 = vpack.c.b16 %v980, %v979
    %997 = vmatprep.subr.bf16.mxu0 0
    %998 = vmatpush1.bf16.msra.mxu0 %v981
    %999 = vmatprep.subr.bf16.mxu0 0
    %1000 = vmatpush1.bf16.msra.mxu0 %v982
    %1001 = vmatprep.subr.bf16.mxu0 0
    %1002 = vmatpush1.bf16.msra.mxu0 %v983
    %1003 = vmatprep.subr.bf16.mxu0 0
    %1004 = vmatpush1.bf16.msra.mxu0 %v984
    %1005 = vmatprep.subr.bf16.mxu0 0
    %1006 = vmatpush1.bf16.msra.mxu0 %v985
    %1007 = vmatprep.subr.bf16.mxu0 0
    %1008 = vmatpush1.bf16.msra.mxu0 %v986
    %1009 = vmatprep.subr.bf16.mxu0 0
    %1010 = vmatpush1.bf16.msra.mxu0 %v987
    %1011 = vmatprep.subr.bf16.mxu0 0
    %1012 = vmatpush1.bf16.msra.mxu0 %v988
    %1013 = vmatprep.subr.bf16.mxu0 0
    %1014 = vmatpush1.bf16.msra.mxu0 0
    %1015 = vmatprep.subr.bf16.mxu0 0
    %1016 = vmatpush1.bf16.msra.mxu0 0
    %1017 = vmatprep.subr.bf16.mxu0 0
    %1018 = vmatpush1.bf16.msra.mxu0 0
    %1019 = vmatprep.subr.bf16.mxu0 0
    %1020 = vmatpush1.bf16.msra.mxu0 0
    %1021 = vmatprep.subr.bf16.mxu0 0
    %1022 = vmatpush1.bf16.msra.mxu0 0
    %1023 = vmatprep.subr.bf16.mxu0 0
    %1024 = vmatpush1.bf16.msra.mxu0 0
    %1025 = vmatprep.subr.bf16.mxu0 0
    %1026 = vmatpush1.bf16.msra.mxu0 0
    %1027 = vmatprep.subr.bf16.mxu0 0
    %1028 = vmatpush1.bf16.msra.mxu0 0
    %1029 = vmatprep.mubr.bf16.mxu0 0
    %1030 = vmatmul.mubr.bf16.gmra.mrb[0].mxu0 %v931
    %v1031 = vpop.f32.mrb[0].mxu0
    %v1032 = vadd.f32 0.0, %v1031
    %v1033 = vpop.f32.mrb[0].mxu0
    %v1034 = vpop.f32.mrb[0].mxu0
    %v1035 = vadd.f32 0.0, %v1034
    %v1036 = vpop.f32.mrb[0].mxu0
    %1037 = vdwg.mxu0
    %v1038 = vld [vmem:[#allocation2] sm:$0xff]
    %v1039 = vld [vmem:[#allocation2 + $0x8] sm:$0xff]
    %v1040 = vadd.f32 %v1038, %v1032
    %v1041 = vadd.f32 %v1039, %v1035
    %1042 = vst.msk [vmem:[#allocation2] sm:$0xff] %vm125, %v1040
    %1043 = vst.msk [vmem:[#allocation2 + $0x8] sm:$0xff] %vm125, %v1041
    %v1044 = vpack.c.bf16 %v247, %v244
    %s1045 = scalar_lea.vmem %s2, 448
    %v1046 = vld [vmem:[%s1045] sm:$0xf]
    %v1047 = vld [vmem:[%s1045 + $0x4] sm:$0xf]
    %v1048 = vld [vmem:[%s1045 + $0x8] sm:$0xf]
    %v1049 = vld [vmem:[%s1045 + $0xc] sm:$0xf]
    %v1050 = vld [vmem:[%s1045 + $0x10] sm:$0xf]
    %v1051 = vld [vmem:[%s1045 + $0x14] sm:$0xf]
    %v1052 = vld [vmem:[%s1045 + $0x18] sm:$0xf]
    %v1053 = vld [vmem:[%s1045 + $0x1c] sm:$0xf]
    %v1054 = vld [vmem:[%s1045 + $0x20] sm:$0xf]
    %v1055 = vld [vmem:[%s1045 + $0x24] sm:$0xf]
    %v1056 = vld [vmem:[%s1045 + $0x28] sm:$0xf]
    %v1057 = vld [vmem:[%s1045 + $0x2c] sm:$0xf]
    %v1058 = vld [vmem:[%s1045 + $0x30] sm:$0xf]
    %v1059 = vld [vmem:[%s1045 + $0x34] sm:$0xf]
    %v1060 = vld [vmem:[%s1045 + $0x38] sm:$0xf]
    %v1061 = vld [vmem:[%s1045 + $0x3c] sm:$0xf]
    %v1078 = vunpack.c.l.b16 %v1046
    %v1079 = vunpack.c.l.b16 %v1047
    %v1080 = vunpack.c.l.b16 %v1048
    %v1081 = vunpack.c.l.b16 %v1049
    %v1082 = vunpack.c.l.b16 %v1050
    %v1083 = vunpack.c.l.b16 %v1051
    %v1084 = vunpack.c.l.b16 %v1052
    %v1085 = vunpack.c.l.b16 %v1053
    %v1086 = vunpack.c.l.b16 %v1054
    %v1087 = vunpack.c.l.b16 %v1055
    %v1088 = vunpack.c.l.b16 %v1056
    %v1089 = vunpack.c.l.b16 %v1057
    %v1090 = vunpack.c.l.b16 %v1058
    %v1091 = vunpack.c.l.b16 %v1059
    %v1092 = vunpack.c.l.b16 %v1060
    %v1093 = vunpack.c.l.b16 %v1061
    %v1094 = vpack.c.b16 %v1079, %v1078
    %v1095 = vpack.c.b16 %v1081, %v1080
    %v1096 = vpack.c.b16 %v1083, %v1082
    %v1097 = vpack.c.b16 %v1085, %v1084
    %v1098 = vpack.c.b16 %v1087, %v1086
    %v1099 = vpack.c.b16 %v1089, %v1088
    %v1100 = vpack.c.b16 %v1091, %v1090
    %v1101 = vpack.c.b16 %v1093, %v1092
    %1110 = vmatprep.subr.bf16.mxu0 0
    %1111 = vmatpush1.bf16.msra.mxu0 %v1094
    %1112 = vmatprep.subr.bf16.mxu0 0
    %1113 = vmatpush1.bf16.msra.mxu0 %v1095
    %1114 = vmatprep.subr.bf16.mxu0 0
    %1115 = vmatpush1.bf16.msra.mxu0 %v1096
    %1116 = vmatprep.subr.bf16.mxu0 0
    %1117 = vmatpush1.bf16.msra.mxu0 %v1097
    %1118 = vmatprep.subr.bf16.mxu0 0
    %1119 = vmatpush1.bf16.msra.mxu0 %v1098
    %1120 = vmatprep.subr.bf16.mxu0 0
    %1121 = vmatpush1.bf16.msra.mxu0 %v1099
    %1122 = vmatprep.subr.bf16.mxu0 0
    %1123 = vmatpush1.bf16.msra.mxu0 %v1100
    %1124 = vmatprep.subr.bf16.mxu0 0
    %1125 = vmatpush1.bf16.msra.mxu0 %v1101
    %1126 = vmatprep.subr.bf16.mxu0 0
    %1127 = vmatpush1.bf16.msra.mxu0 0
    %1128 = vmatprep.subr.bf16.mxu0 0
    %1129 = vmatpush1.bf16.msra.mxu0 0
    %1130 = vmatprep.subr.bf16.mxu0 0
    %1131 = vmatpush1.bf16.msra.mxu0 0
    %1132 = vmatprep.subr.bf16.mxu0 0
    %1133 = vmatpush1.bf16.msra.mxu0 0
    %1134 = vmatprep.subr.bf16.mxu0 0
    %1135 = vmatpush1.bf16.msra.mxu0 0
    %1136 = vmatprep.subr.bf16.mxu0 0
    %1137 = vmatpush1.bf16.msra.mxu0 0
    %1138 = vmatprep.subr.bf16.mxu0 0
    %1139 = vmatpush1.bf16.msra.mxu0 0
    %1140 = vmatprep.subr.bf16.mxu0 0
    %1141 = vmatpush1.bf16.msra.mxu0 0
    %1142 = vmatprep.mubr.bf16.mxu0 0
    %1143 = vmatmul.mubr.bf16.gmra.mrb[0].mxu0 %v1044
    %v1144 = vpop.f32.mrb[0].mxu0
    %v1145 = vadd.f32 0.0, %v1144
    %v1146 = vpop.f32.mrb[0].mxu0
    %v1147 = vpop.f32.mrb[0].mxu0
    %v1148 = vadd.f32 0.0, %v1147
    %v1149 = vpop.f32.mrb[0].mxu0
    %1150 = vdwg.mxu0
    %v1151 = vld [vmem:[#allocation2] sm:$0xff]
    %v1152 = vld [vmem:[#allocation2 + $0x8] sm:$0xff]
    %v1153 = vadd.f32 %v1151, %v1145
    %v1154 = vadd.f32 %v1152, %v1148
    %1155 = vst.msk [vmem:[#allocation2] sm:$0xff] %vm125, %v1153
    %1156 = vst.msk [vmem:[#allocation2 + $0x8] sm:$0xff] %vm125, %v1154
    %v1157 = vpack.c.bf16 %v255, %v252
    %s1158 = scalar_lea.vmem %s2, 512
    %v1159 = vld [vmem:[%s1158] sm:$0xf]
    %v1160 = vld [vmem:[%s1158 + $0x4] sm:$0xf]
    %v1161 = vld [vmem:[%s1158 + $0x8] sm:$0xf]
    %v1162 = vld [vmem:[%s1158 + $0xc] sm:$0xf]
    %v1163 = vld [vmem:[%s1158 + $0x10] sm:$0xf]
    %v1164 = vld [vmem:[%s1158 + $0x14] sm:$0xf]
    %v1165 = vld [vmem:[%s1158 + $0x18] sm:$0xf]
    %v1166 = vld [vmem:[%s1158 + $0x1c] sm:$0xf]
    %v1167 = vld [vmem:[%s1158 + $0x20] sm:$0xf]
    %v1168 = vld [vmem:[%s1158 + $0x24] sm:$0xf]
    %v1169 = vld [vmem:[%s1158 + $0x28] sm:$0xf]
    %v1170 = vld [vmem:[%s1158 + $0x2c] sm:$0xf]
    %v1171 = vld [vmem:[%s1158 + $0x30] sm:$0xf]
    %v1172 = vld [vmem:[%s1158 + $0x34] sm:$0xf]
    %v1173 = vld [vmem:[%s1158 + $0x38] sm:$0xf]
    %v1174 = vld [vmem:[%s1158 + $0x3c] sm:$0xf]
    %v1191 = vunpack.c.l.b16 %v1159
    %v1192 = vunpack.c.l.b16 %v1160
    %v1193 = vunpack.c.l.b16 %v1161
    %v1194 = vunpack.c.l.b16 %v1162
    %v1195 = vunpack.c.l.b16 %v1163
    %v1196 = vunpack.c.l.b16 %v1164
    %v1197 = vunpack.c.l.b16 %v1165
    %v1198 = vunpack.c.l.b16 %v1166
    %v1199 = vunpack.c.l.b16 %v1167
    %v1200 = vunpack.c.l.b16 %v1168
    %v1201 = vunpack.c.l.b16 %v1169
    %v1202 = vunpack.c.l.b16 %v1170
    %v1203 = vunpack.c.l.b16 %v1171
    %v1204 = vunpack.c.l.b16 %v1172
    %v1205 = vunpack.c.l.b16 %v1173
    %v1206 = vunpack.c.l.b16 %v1174
    %v1207 = vpack.c.b16 %v1192, %v1191
    %v1208 = vpack.c.b16 %v1194, %v1193
    %v1209 = vpack.c.b16 %v1196, %v1195
    %v1210 = vpack.c.b16 %v1198, %v1197
    %v1211 = vpack.c.b16 %v1200, %v1199
    %v1212 = vpack.c.b16 %v1202, %v1201
    %v1213 = vpack.c.b16 %v1204, %v1203
    %v1214 = vpack.c.b16 %v1206, %v1205
    %1223 = vmatprep.subr.bf16.mxu0 0
    %1224 = vmatpush1.bf16.msra.mxu0 %v1207
    %1225 = vmatprep.subr.bf16.mxu0 0
    %1226 = vmatpush1.bf16.msra.mxu0 %v1208
    %1227 = vmatprep.subr.bf16.mxu0 0
    %1228 = vmatpush1.bf16.msra.mxu0 %v1209
    %1229 = vmatprep.subr.bf16.mxu0 0
    %1230 = vmatpush1.bf16.msra.mxu0 %v1210
    %1231 = vmatprep.subr.bf16.mxu0 0
    %1232 = vmatpush1.bf16.msra.mxu0 %v1211
    %1233 = vmatprep.subr.bf16.mxu0 0
    %1234 = vmatpush1.bf16.msra.mxu0 %v1212
    %1235 = vmatprep.subr.bf16.mxu0 0
    %1236 = vmatpush1.bf16.msra.mxu0 %v1213
    %1237 = vmatprep.subr.bf16.mxu0 0
    %1238 = vmatpush1.bf16.msra.mxu0 %v1214
    %1239 = vmatprep.subr.bf16.mxu0 0
    %1240 = vmatpush1.bf16.msra.mxu0 0
    %1241 = vmatprep.subr.bf16.mxu0 0
    %1242 = vmatpush1.bf16.msra.mxu0 0
    %1243 = vmatprep.subr.bf16.mxu0 0
    %1244 = vmatpush1.bf16.msra.mxu0 0
    %1245 = vmatprep.subr.bf16.mxu0 0
    %1246 = vmatpush1.bf16.msra.mxu0 0
    %1247 = vmatprep.subr.bf16.mxu0 0
    %1248 = vmatpush1.bf16.msra.mxu0 0
    %1249 = vmatprep.subr.bf16.mxu0 0
    %1250 = vmatpush1.bf16.msra.mxu0 0
    %1251 = vmatprep.subr.bf16.mxu0 0
    %1252 = vmatpush1.bf16.msra.mxu0 0
    %1253 = vmatprep.subr.bf16.mxu0 0
    %1254 = vmatpush1.bf16.msra.mxu0 0
    %1255 = vmatprep.mubr.bf16.mxu0 0
    %1256 = vmatmul.mubr.bf16.gmra.mrb[0].mxu0 %v1157
    %v1257 = vpop.f32.mrb[0].mxu0
    %v1258 = vadd.f32 0.0, %v1257
    %v1259 = vpop.f32.mrb[0].mxu0
    %v1260 = vpop.f32.mrb[0].mxu0
    %v1261 = vadd.f32 0.0, %v1260
    %v1262 = vpop.f32.mrb[0].mxu0
    %1263 = vdwg.mxu0
    %v1264 = vld [vmem:[#allocation2] sm:$0xff]
    %v1265 = vld [vmem:[#allocation2 + $0x8] sm:$0xff]
    %v1266 = vadd.f32 %v1264, %v1258
    %v1267 = vadd.f32 %v1265, %v1261
    %1268 = vst.msk [vmem:[#allocation2] sm:$0xff] %vm125, %v1266
    %1269 = vst.msk [vmem:[#allocation2 + $0x8] sm:$0xff] %vm125, %v1267
    %v1270 = vld [vmem:[#allocation2] sm:$0xff]
    %v1271 = vld [vmem:[#allocation2 + $0x8] sm:$0xff]
    %v1272 = vmax.f32 %v1270, 0.0
    %v1273 = vmax.f32 %v1271, 0.0
    %v1274 = vpack.c.bf16 %v1273, %v1272
    %v1275 = vld [vmem:[%s3] sm:$0xf]
    %v1276 = vld [vmem:[%s3 + $0x4] sm:$0xf]
    %v1277 = vld [vmem:[%s3 + $0x8] sm:$0xf]
    %v1278 = vld [vmem:[%s3 + $0xc] sm:$0xf]
    %v1279 = vld [vmem:[%s3 + $0x10] sm:$0xf]
    %v1280 = vld [vmem:[%s3 + $0x14] sm:$0xf]
    %v1281 = vld [vmem:[%s3 + $0x18] sm:$0xf]
    %v1282 = vld [vmem:[%s3 + $0x1c] sm:$0xf]
    %v1283 = vld [vmem:[%s3 + $0x20] sm:$0xf]
    %v1293 = vunpack.c.l.b16 %v1275
    %v1294 = vunpack.c.l.b16 %v1276
    %v1295 = vunpack.c.l.b16 %v1277
    %v1296 = vunpack.c.l.b16 %v1278
    %v1297 = vunpack.c.l.b16 %v1279
    %v1298 = vunpack.c.l.b16 %v1280
    %v1299 = vunpack.c.l.b16 %v1281
    %v1300 = vunpack.c.l.b16 %v1282
    %v1301 = vunpack.c.l.b16 %v1283
    %v1302 = vpack.c.b16 %v1294, %v1293
    %v1303 = vpack.c.b16 %v1296, %v1295
    %v1304 = vpack.c.b16 %v1298, %v1297
    %v1305 = vpack.c.b16 %v1300, %v1299
    %v1306 = vpack.c.b16 %v1301, %v1301
    %vm1307 = vcmask 130048
    %v1309 = vsel %vm1307, %v1302, 0
    %v1312 = vsel %vm1307, %v1303, 0
    %v1315 = vsel %vm1307, %v1304, 0
    %v1318 = vsel %vm1307, %v1305, 0
    %v1321 = vsel %vm1307, %v1306, 0
    %1323 = vmatprep.subr.bf16.mxu0 0
    %1324 = vmatpush1.bf16.msra.mxu0 %v1274
    %1325 = vmatprep.subr.bf16.mxu0 0
    %1326 = vmatpush1.bf16.msra.mxu0 0
    %1327 = vmatprep.subr.bf16.mxu0 0
    %1328 = vmatpush1.bf16.msra.mxu0 0
    %1329 = vmatprep.subr.bf16.mxu0 0
    %1330 = vmatpush1.bf16.msra.mxu0 0
    %1331 = vmatprep.subr.bf16.mxu0 0
    %1332 = vmatpush1.bf16.msra.mxu0 0
    %1333 = vmatprep.subr.bf16.mxu0 0
    %1334 = vmatpush1.bf16.msra.mxu0 0
    %1335 = vmatprep.subr.bf16.mxu0 0
    %1336 = vmatpush1.bf16.msra.mxu0 0
    %1337 = vmatprep.subr.bf16.mxu0 0
    %1338 = vmatpush1.bf16.msra.mxu0 0
    %1339 = vmatprep.subr.bf16.mxu0 0
    %1340 = vmatpush1.bf16.msra.mxu0 0
    %1341 = vmatprep.subr.bf16.mxu0 0
    %1342 = vmatpush1.bf16.msra.mxu0 0
    %1343 = vmatprep.subr.bf16.mxu0 0
    %1344 = vmatpush1.bf16.msra.mxu0 0
    %1345 = vmatprep.subr.bf16.mxu0 0
    %1346 = vmatpush1.bf16.msra.mxu0 0
    %1347 = vmatprep.subr.bf16.mxu0 0
    %1348 = vmatpush1.bf16.msra.mxu0 0
    %1349 = vmatprep.subr.bf16.mxu0 0
    %1350 = vmatpush1.bf16.msra.mxu0 0
    %1351 = vmatprep.subr.bf16.mxu0 0
    %1352 = vmatpush1.bf16.msra.mxu0 0
    %1353 = vmatprep.subr.bf16.mxu0 0
    %1354 = vmatpush1.bf16.msra.mxu0 0
    %1355 = vmatprep.mubr.bf16.mxu0 0
    %1356 = vmatmul.mubr.bf16.gmra.mrb[0].mxu0 %v1309
    %v1357 = vpop.f32.mrb[0].mxu0
    %v1358 = vadd.f32 0.0, %v1357
    %v1359 = vpop.f32.mrb[0].mxu0
    %v1360 = vpop.f32.mrb[0].mxu0
    %v1361 = vadd.f32 0.0, %v1360
    %v1362 = vpop.f32.mrb[0].mxu0
    %1363 = vmatprep.mubr.bf16.mxu0 0
    %1364 = vmatmul.mubr.bf16.gmra.mrb[0].mxu0 %v1312
    %v1365 = vpop.f32.mrb[0].mxu0
    %v1366 = vadd.f32 0.0, %v1365
    %v1367 = vpop.f32.mrb[0].mxu0
    %v1368 = vpop.f32.mrb[0].mxu0
    %v1369 = vadd.f32 0.0, %v1368
    %v1370 = vpop.f32.mrb[0].mxu0
    %1371 = vmatprep.mubr.bf16.mxu0 0
    %1372 = vmatmul.mubr.bf16.gmra.mrb[0].mxu0 %v1315
    %v1373 = vpop.f32.mrb[0].mxu0
    %v1374 = vadd.f32 0.0, %v1373
    %v1375 = vpop.f32.mrb[0].mxu0
    %v1376 = vpop.f32.mrb[0].mxu0
    %v1377 = vadd.f32 0.0, %v1376
    %v1378 = vpop.f32.mrb[0].mxu0
    %1379 = vmatprep.mubr.bf16.mxu0 0
    %1380 = vmatmul.mubr.bf16.gmra.mrb[0].mxu0 %v1318
    %v1381 = vpop.f32.mrb[0].mxu0
    %v1382 = vadd.f32 0.0, %v1381
    %v1383 = vpop.f32.mrb[0].mxu0
    %v1384 = vpop.f32.mrb[0].mxu0
    %v1385 = vadd.f32 0.0, %v1384
    %v1386 = vpop.f32.mrb[0].mxu0
    %1387 = vmatprep.mubr.bf16.mxu0 0
    %1388 = vmatmul.mubr.bf16.gmra.mrb[0].mxu0 %v1321
    %v1389 = vpop.f32.mrb[0].mxu0
    %v1390 = vadd.f32 0.0, %v1389
    %v1391 = vpop.f32.mrb[0].mxu0
    %v1392 = vpop.f32.mrb[0].mxu0
    %v1393 = vpop.f32.mrb[0].mxu0
    %1394 = vdwg.mxu0
    %v1395 = vpack.c.bf16 %v1358, %v1358
    %v1396 = vld [vmem:[%s4] sm:$0xf]
    %v1397 = vld [vmem:[%s4 + $0x4] sm:$0xf]
    %v1398 = vld [vmem:[%s4 + $0x8] sm:$0xf]
    %v1399 = vld [vmem:[%s4 + $0xc] sm:$0xf]
    %v1400 = vld [vmem:[%s4 + $0x10] sm:$0xf]
    %v1401 = vld [vmem:[%s4 + $0x14] sm:$0xf]
    %v1402 = vld [vmem:[%s4 + $0x18] sm:$0xf]
    %v1403 = vld [vmem:[%s4 + $0x1c] sm:$0xf]
    %v1412 = vunpack.c.l.b16 %v1396
    %v1413 = vunpack.c.l.b16 %v1397
    %v1414 = vunpack.c.l.b16 %v1398
    %v1415 = vunpack.c.l.b16 %v1399
    %v1416 = vunpack.c.l.b16 %v1400
    %v1417 = vunpack.c.l.b16 %v1401
    %v1418 = vunpack.c.l.b16 %v1402
    %v1419 = vunpack.c.l.b16 %v1403
    %v1420 = vpack.c.b16 %v1413, %v1412
    %v1421 = vpack.c.b16 %v1415, %v1414
    %v1422 = vpack.c.b16 %v1417, %v1416
    %v1423 = vpack.c.b16 %v1419, %v1418
    %v1429 = vsel %vm125, %v1395, 0
    %1431 = vmatprep.subr.bf16.mxu0 0
    %1432 = vmatpush1.bf16.msra.mxu0 %v1420
    %1433 = vmatprep.subr.bf16.mxu0 0
    %1434 = vmatpush1.bf16.msra.mxu0 %v1421
    %1435 = vmatprep.subr.bf16.mxu0 0
    %1436 = vmatpush1.bf16.msra.mxu0 %v1422
    %1437 = vmatprep.subr.bf16.mxu0 0
    %1438 = vmatpush1.bf16.msra.mxu0 %v1423
    %1439 = vmatprep.subr.bf16.mxu0 0
    %1440 = vmatpush1.bf16.msra.mxu0 0
    %1441 = vmatprep.subr.bf16.mxu0 0
    %1442 = vmatpush1.bf16.msra.mxu0 0
    %1443 = vmatprep.subr.bf16.mxu0 0
    %1444 = vmatpush1.bf16.msra.mxu0 0
    %1445 = vmatprep.subr.bf16.mxu0 0
    %1446 = vmatpush1.bf16.msra.mxu0 0
    %1447 = vmatprep.subr.bf16.mxu0 0
    %1448 = vmatpush1.bf16.msra.mxu0 0
    %1449 = vmatprep.subr.bf16.mxu0 0
    %1450 = vmatpush1.bf16.msra.mxu0 0
    %1451 = vmatprep.subr.bf16.mxu0 0
    %1452 = vmatpush1.bf16.msra.mxu0 0
    %1453 = vmatprep.subr.bf16.mxu0 0
    %1454 = vmatpush1.bf16.msra.mxu0 0
    %1455 = vmatprep.subr.bf16.mxu0 0
    %1456 = vmatpush1.bf16.msra.mxu0 0
    %1457 = vmatprep.subr.bf16.mxu0 0
    %1458 = vmatpush1.bf16.msra.mxu0 0
    %1459 = vmatprep.subr.bf16.mxu0 0
    %1460 = vmatpush1.bf16.msra.mxu0 0
    %1461 = vmatprep.subr.bf16.mxu0 0
    %1462 = vmatpush1.bf16.msra.mxu0 0
    %1463 = vmatprep.mubr.bf16.mxu0 0
    %1464 = vmatmul.mubr.bf16.gmra.mrb[0].mxu0 %v1429
    %v1465 = vpop.f32.mrb[0].mxu0
    %v1466 = vadd.f32 0.0, %v1465
    %v1467 = vpop.f32.mrb[0].mxu0
    %v1468 = vpop.f32.mrb[0].mxu0
    %v1469 = vpop.f32.mrb[0].mxu0
    %1470 = vdwg.mxu0
    %vm1471 = vcmask 261120
    %1472 = vst.msk [vmem:[#allocation3] sm:$0xff] %vm1471, %v1466
    %v1473 = vpack.c.bf16 %v1361, %v1361
    %s1474 = scalar_lea.vmem %s4, 32
    %v1475 = vld [vmem:[%s1474] sm:$0xf]
    %v1476 = vld [vmem:[%s1474 + $0x4] sm:$0xf]
    %v1477 = vld [vmem:[%s1474 + $0x8] sm:$0xf]
    %v1478 = vld [vmem:[%s1474 + $0xc] sm:$0xf]
    %v1479 = vld [vmem:[%s1474 + $0x10] sm:$0xf]
    %v1480 = vld [vmem:[%s1474 + $0x14] sm:$0xf]
    %v1481 = vld [vmem:[%s1474 + $0x18] sm:$0xf]
    %v1482 = vld [vmem:[%s1474 + $0x1c] sm:$0xf]
    %v1491 = vunpack.c.l.b16 %v1475
    %v1492 = vunpack.c.l.b16 %v1476
    %v1493 = vunpack.c.l.b16 %v1477
    %v1494 = vunpack.c.l.b16 %v1478
    %v1495 = vunpack.c.l.b16 %v1479
    %v1496 = vunpack.c.l.b16 %v1480
    %v1497 = vunpack.c.l.b16 %v1481
    %v1498 = vunpack.c.l.b16 %v1482
    %v1499 = vpack.c.b16 %v1492, %v1491
    %v1500 = vpack.c.b16 %v1494, %v1493
    %v1501 = vpack.c.b16 %v1496, %v1495
    %v1502 = vpack.c.b16 %v1498, %v1497
    %v1508 = vsel %vm125, %v1473, 0
    %1510 = vmatprep.subr.bf16.mxu0 0
    %1511 = vmatpush1.bf16.msra.mxu0 %v1499
    %1512 = vmatprep.subr.bf16.mxu0 0
    %1513 = vmatpush1.bf16.msra.mxu0 %v1500
    %1514 = vmatprep.subr.bf16.mxu0 0
    %1515 = vmatpush1.bf16.msra.mxu0 %v1501
    %1516 = vmatprep.subr.bf16.mxu0 0
    %1517 = vmatpush1.bf16.msra.mxu0 %v1502
    %1518 = vmatprep.subr.bf16.mxu0 0
    %1519 = vmatpush1.bf16.msra.mxu0 0
    %1520 = vmatprep.subr.bf16.mxu0 0
    %1521 = vmatpush1.bf16.msra.mxu0 0
    %1522 = vmatprep.subr.bf16.mxu0 0
    %1523 = vmatpush1.bf16.msra.mxu0 0
    %1524 = vmatprep.subr.bf16.mxu0 0
    %1525 = vmatpush1.bf16.msra.mxu0 0
    %1526 = vmatprep.subr.bf16.mxu0 0
    %1527 = vmatpush1.bf16.msra.mxu0 0
    %1528 = vmatprep.subr.bf16.mxu0 0
    %1529 = vmatpush1.bf16.msra.mxu0 0
    %1530 = vmatprep.subr.bf16.mxu0 0
    %1531 = vmatpush1.bf16.msra.mxu0 0
    %1532 = vmatprep.subr.bf16.mxu0 0
    %1533 = vmatpush1.bf16.msra.mxu0 0
    %1534 = vmatprep.subr.bf16.mxu0 0
    %1535 = vmatpush1.bf16.msra.mxu0 0
    %1536 = vmatprep.subr.bf16.mxu0 0
    %1537 = vmatpush1.bf16.msra.mxu0 0
    %1538 = vmatprep.subr.bf16.mxu0 0
    %1539 = vmatpush1.bf16.msra.mxu0 0
    %1540 = vmatprep.subr.bf16.mxu0 0
    %1541 = vmatpush1.bf16.msra.mxu0 0
    %1542 = vmatprep.mubr.bf16.mxu0 0
    %1543 = vmatmul.mubr.bf16.gmra.mrb[0].mxu0 %v1508
    %v1544 = vpop.f32.mrb[0].mxu0
    %v1545 = vadd.f32 0.0, %v1544
    %v1546 = vpop.f32.mrb[0].mxu0
    %v1547 = vpop.f32.mrb[0].mxu0
    %v1548 = vpop.f32.mrb[0].mxu0
    %1549 = vdwg.mxu0
    %v1550 = vld [vmem:[#allocation3] sm:$0xff]
    %v1551 = vadd.f32 %v1550, %v1545
    %1552 = vst.msk [vmem:[#allocation3] sm:$0xff] %vm1471, %v1551
    %v1553 = vpack.c.bf16 %v1366, %v1366
    %s1554 = scalar_lea.vmem %s4, 64
    %v1555 = vld [vmem:[%s1554] sm:$0xf]
    %v1556 = vld [vmem:[%s1554 + $0x4] sm:$0xf]
    %v1557 = vld [vmem:[%s1554 + $0x8] sm:$0xf]
    %v1558 = vld [vmem:[%s1554 + $0xc] sm:$0xf]
    %v1559 = vld [vmem:[%s1554 + $0x10] sm:$0xf]
    %v1560 = vld [vmem:[%s1554 + $0x14] sm:$0xf]
    %v1561 = vld [vmem:[%s1554 + $0x18] sm:$0xf]
    %v1562 = vld [vmem:[%s1554 + $0x1c] sm:$0xf]
    %v1571 = vunpack.c.l.b16 %v1555
    %v1572 = vunpack.c.l.b16 %v1556
    %v1573 = vunpack.c.l.b16 %v1557
    %v1574 = vunpack.c.l.b16 %v1558
    %v1575 = vunpack.c.l.b16 %v1559
    %v1576 = vunpack.c.l.b16 %v1560
    %v1577 = vunpack.c.l.b16 %v1561
    %v1578 = vunpack.c.l.b16 %v1562
    %v1579 = vpack.c.b16 %v1572, %v1571
    %v1580 = vpack.c.b16 %v1574, %v1573
    %v1581 = vpack.c.b16 %v1576, %v1575
    %v1582 = vpack.c.b16 %v1578, %v1577
    %v1588 = vsel %vm125, %v1553, 0
    %1590 = vmatprep.subr.bf16.mxu0 0
    %1591 = vmatpush1.bf16.msra.mxu0 %v1579
    %1592 = vmatprep.subr.bf16.mxu0 0
    %1593 = vmatpush1.bf16.msra.mxu0 %v1580
    %1594 = vmatprep.subr.bf16.mxu0 0
    %1595 = vmatpush1.bf16.msra.mxu0 %v1581
    %1596 = vmatprep.subr.bf16.mxu0 0
    %1597 = vmatpush1.bf16.msra.mxu0 %v1582
    %1598 = vmatprep.subr.bf16.mxu0 0
    %1599 = vmatpush1.bf16.msra.mxu0 0
    %1600 = vmatprep.subr.bf16.mxu0 0
    %1601 = vmatpush1.bf16.msra.mxu0 0
    %1602 = vmatprep.subr.bf16.mxu0 0
    %1603 = vmatpush1.bf16.msra.mxu0 0
    %1604 = vmatprep.subr.bf16.mxu0 0
    %1605 = vmatpush1.bf16.msra.mxu0 0
    %1606 = vmatprep.subr.bf16.mxu0 0
    %1607 = vmatpush1.bf16.msra.mxu0 0
    %1608 = vmatprep.subr.bf16.mxu0 0
    %1609 = vmatpush1.bf16.msra.mxu0 0
    %1610 = vmatprep.subr.bf16.mxu0 0
    %1611 = vmatpush1.bf16.msra.mxu0 0
    %1612 = vmatprep.subr.bf16.mxu0 0
    %1613 = vmatpush1.bf16.msra.mxu0 0
    %1614 = vmatprep.subr.bf16.mxu0 0
    %1615 = vmatpush1.bf16.msra.mxu0 0
    %1616 = vmatprep.subr.bf16.mxu0 0
    %1617 = vmatpush1.bf16.msra.mxu0 0
    %1618 = vmatprep.subr.bf16.mxu0 0
    %1619 = vmatpush1.bf16.msra.mxu0 0
    %1620 = vmatprep.subr.bf16.mxu0 0
    %1621 = vmatpush1.bf16.msra.mxu0 0
    %1622 = vmatprep.mubr.bf16.mxu0 0
    %1623 = vmatmul.mubr.bf16.gmra.mrb[0].mxu0 %v1588
    %v1624 = vpop.f32.mrb[0].mxu0
    %v1625 = vadd.f32 0.0, %v1624
    %v1626 = vpop.f32.mrb[0].mxu0
    %v1627 = vpop.f32.mrb[0].mxu0
    %v1628 = vpop.f32.mrb[0].mxu0
    %1629 = vdwg.mxu0
    %v1630 = vld [vmem:[#allocation3] sm:$0xff]
    %v1631 = vadd.f32 %v1630, %v1625
    %1632 = vst.msk [vmem:[#allocation3] sm:$0xff] %vm1471, %v1631
    %v1633 = vpack.c.bf16 %v1369, %v1369
    %s1634 = scalar_lea.vmem %s4, 96
    %v1635 = vld [vmem:[%s1634] sm:$0xf]
    %v1636 = vld [vmem:[%s1634 + $0x4] sm:$0xf]
    %v1637 = vld [vmem:[%s1634 + $0x8] sm:$0xf]
    %v1638 = vld [vmem:[%s1634 + $0xc] sm:$0xf]
    %v1639 = vld [vmem:[%s1634 + $0x10] sm:$0xf]
    %v1640 = vld [vmem:[%s1634 + $0x14] sm:$0xf]
    %v1641 = vld [vmem:[%s1634 + $0x18] sm:$0xf]
    %v1642 = vld [vmem:[%s1634 + $0x1c] sm:$0xf]
    %v1651 = vunpack.c.l.b16 %v1635
    %v1652 = vunpack.c.l.b16 %v1636
    %v1653 = vunpack.c.l.b16 %v1637
    %v1654 = vunpack.c.l.b16 %v1638
    %v1655 = vunpack.c.l.b16 %v1639
    %v1656 = vunpack.c.l.b16 %v1640
    %v1657 = vunpack.c.l.b16 %v1641
    %v1658 = vunpack.c.l.b16 %v1642
    %v1659 = vpack.c.b16 %v1652, %v1651
    %v1660 = vpack.c.b16 %v1654, %v1653
    %v1661 = vpack.c.b16 %v1656, %v1655
    %v1662 = vpack.c.b16 %v1658, %v1657
    %v1668 = vsel %vm125, %v1633, 0
    %1670 = vmatprep.subr.bf16.mxu0 0
    %1671 = vmatpush1.bf16.msra.mxu0 %v1659
    %1672 = vmatprep.subr.bf16.mxu0 0
    %1673 = vmatpush1.bf16.msra.mxu0 %v1660
    %1674 = vmatprep.subr.bf16.mxu0 0
    %1675 = vmatpush1.bf16.msra.mxu0 %v1661
    %1676 = vmatprep.subr.bf16.mxu0 0
    %1677 = vmatpush1.bf16.msra.mxu0 %v1662
    %1678 = vmatprep.subr.bf16.mxu0 0
    %1679 = vmatpush1.bf16.msra.mxu0 0
    %1680 = vmatprep.subr.bf16.mxu0 0
    %1681 = vmatpush1.bf16.msra.mxu0 0
    %1682 = vmatprep.subr.bf16.mxu0 0
    %1683 = vmatpush1.bf16.msra.mxu0 0
    %1684 = vmatprep.subr.bf16.mxu0 0
    %1685 = vmatpush1.bf16.msra.mxu0 0
    %1686 = vmatprep.subr.bf16.mxu0 0
    %1687 = vmatpush1.bf16.msra.mxu0 0
    %1688 = vmatprep.subr.bf16.mxu0 0
    %1689 = vmatpush1.bf16.msra.mxu0 0
    %1690 = vmatprep.subr.bf16.mxu0 0
    %1691 = vmatpush1.bf16.msra.mxu0 0
    %1692 = vmatprep.subr.bf16.mxu0 0
    %1693 = vmatpush1.bf16.msra.mxu0 0
    %1694 = vmatprep.subr.bf16.mxu0 0
    %1695 = vmatpush1.bf16.msra.mxu0 0
    %1696 = vmatprep.subr.bf16.mxu0 0
    %1697 = vmatpush1.bf16.msra.mxu0 0
    %1698 = vmatprep.subr.bf16.mxu0 0
    %1699 = vmatpush1.bf16.msra.mxu0 0
    %1700 = vmatprep.subr.bf16.mxu0 0
    %1701 = vmatpush1.bf16.msra.mxu0 0
    %1702 = vmatprep.mubr.bf16.mxu0 0
    %1703 = vmatmul.mubr.bf16.gmra.mrb[0].mxu0 %v1668
    %v1704 = vpop.f32.mrb[0].mxu0
    %v1705 = vadd.f32 0.0, %v1704
    %v1706 = vpop.f32.mrb[0].mxu0
    %v1707 = vpop.f32.mrb[0].mxu0
    %v1708 = vpop.f32.mrb[0].mxu0
    %1709 = vdwg.mxu0
    %v1710 = vld [vmem:[#allocation3] sm:$0xff]
    %v1711 = vadd.f32 %v1710, %v1705
    %1712 = vst.msk [vmem:[#allocation3] sm:$0xff] %vm1471, %v1711
    %v1713 = vpack.c.bf16 %v1374, %v1374
    %s1714 = scalar_lea.vmem %s4, 128
    %v1715 = vld [vmem:[%s1714] sm:$0xf]
    %v1716 = vld [vmem:[%s1714 + $0x4] sm:$0xf]
    %v1717 = vld [vmem:[%s1714 + $0x8] sm:$0xf]
    %v1718 = vld [vmem:[%s1714 + $0xc] sm:$0xf]
    %v1719 = vld [vmem:[%s1714 + $0x10] sm:$0xf]
    %v1720 = vld [vmem:[%s1714 + $0x14] sm:$0xf]
    %v1721 = vld [vmem:[%s1714 + $0x18] sm:$0xf]
    %v1722 = vld [vmem:[%s1714 + $0x1c] sm:$0xf]
    %v1731 = vunpack.c.l.b16 %v1715
    %v1732 = vunpack.c.l.b16 %v1716
    %v1733 = vunpack.c.l.b16 %v1717
    %v1734 = vunpack.c.l.b16 %v1718
    %v1735 = vunpack.c.l.b16 %v1719
    %v1736 = vunpack.c.l.b16 %v1720
    %v1737 = vunpack.c.l.b16 %v1721
    %v1738 = vunpack.c.l.b16 %v1722
    %v1739 = vpack.c.b16 %v1732, %v1731
    %v1740 = vpack.c.b16 %v1734, %v1733
    %v1741 = vpack.c.b16 %v1736, %v1735
    %v1742 = vpack.c.b16 %v1738, %v1737
    %v1748 = vsel %vm125, %v1713, 0
    %1750 = vmatprep.subr.bf16.mxu0 0
    %1751 = vmatpush1.bf16.msra.mxu0 %v1739
    %1752 = vmatprep.subr.bf16.mxu0 0
    %1753 = vmatpush1.bf16.msra.mxu0 %v1740
    %1754 = vmatprep.subr.bf16.mxu0 0
    %1755 = vmatpush1.bf16.msra.mxu0 %v1741
    %1756 = vmatprep.subr.bf16.mxu0 0
    %1757 = vmatpush1.bf16.msra.mxu0 %v1742
    %1758 = vmatprep.subr.bf16.mxu0 0
    %1759 = vmatpush1.bf16.msra.mxu0 0
    %1760 = vmatprep.subr.bf16.mxu0 0
    %1761 = vmatpush1.bf16.msra.mxu0 0
    %1762 = vmatprep.subr.bf16.mxu0 0
    %1763 = vmatpush1.bf16.msra.mxu0 0
    %1764 = vmatprep.subr.bf16.mxu0 0
    %1765 = vmatpush1.bf16.msra.mxu0 0
    %1766 = vmatprep.subr.bf16.mxu0 0
    %1767 = vmatpush1.bf16.msra.mxu0 0
    %1768 = vmatprep.subr.bf16.mxu0 0
    %1769 = vmatpush1.bf16.msra.mxu0 0
    %1770 = vmatprep.subr.bf16.mxu0 0
    %1771 = vmatpush1.bf16.msra.mxu0 0
    %1772 = vmatprep.subr.bf16.mxu0 0
    %1773 = vmatpush1.bf16.msra.mxu0 0
    %1774 = vmatprep.subr.bf16.mxu0 0
    %1775 = vmatpush1.bf16.msra.mxu0 0
    %1776 = vmatprep.subr.bf16.mxu0 0
    %1777 = vmatpush1.bf16.msra.mxu0 0
    %1778 = vmatprep.subr.bf16.mxu0 0
    %1779 = vmatpush1.bf16.msra.mxu0 0
    %1780 = vmatprep.subr.bf16.mxu0 0
    %1781 = vmatpush1.bf16.msra.mxu0 0
    %1782 = vmatprep.mubr.bf16.mxu0 0
    %1783 = vmatmul.mubr.bf16.gmra.mrb[0].mxu0 %v1748
    %v1784 = vpop.f32.mrb[0].mxu0
    %v1785 = vadd.f32 0.0, %v1784
    %v1786 = vpop.f32.mrb[0].mxu0
    %v1787 = vpop.f32.mrb[0].mxu0
    %v1788 = vpop.f32.mrb[0].mxu0
    %1789 = vdwg.mxu0
    %v1790 = vld [vmem:[#allocation3] sm:$0xff]
    %v1791 = vadd.f32 %v1790, %v1785
    %1792 = vst.msk [vmem:[#allocation3] sm:$0xff] %vm1471, %v1791
    %v1793 = vpack.c.bf16 %v1377, %v1377
    %s1794 = scalar_lea.vmem %s4, 160
    %v1795 = vld [vmem:[%s1794] sm:$0xf]
    %v1796 = vld [vmem:[%s1794 + $0x4] sm:$0xf]
    %v1797 = vld [vmem:[%s1794 + $0x8] sm:$0xf]
    %v1798 = vld [vmem:[%s1794 + $0xc] sm:$0xf]
    %v1799 = vld [vmem:[%s1794 + $0x10] sm:$0xf]
    %v1800 = vld [vmem:[%s1794 + $0x14] sm:$0xf]
    %v1801 = vld [vmem:[%s1794 + $0x18] sm:$0xf]
    %v1802 = vld [vmem:[%s1794 + $0x1c] sm:$0xf]
    %v1811 = vunpack.c.l.b16 %v1795
    %v1812 = vunpack.c.l.b16 %v1796
    %v1813 = vunpack.c.l.b16 %v1797
    %v1814 = vunpack.c.l.b16 %v1798
    %v1815 = vunpack.c.l.b16 %v1799
    %v1816 = vunpack.c.l.b16 %v1800
    %v1817 = vunpack.c.l.b16 %v1801
    %v1818 = vunpack.c.l.b16 %v1802
    %v1819 = vpack.c.b16 %v1812, %v1811
    %v1820 = vpack.c.b16 %v1814, %v1813
    %v1821 = vpack.c.b16 %v1816, %v1815
    %v1822 = vpack.c.b16 %v1818, %v1817
    %v1828 = vsel %vm125, %v1793, 0
    %1830 = vmatprep.subr.bf16.mxu0 0
    %1831 = vmatpush1.bf16.msra.mxu0 %v1819
    %1832 = vmatprep.subr.bf16.mxu0 0
    %1833 = vmatpush1.bf16.msra.mxu0 %v1820
    %1834 = vmatprep.subr.bf16.mxu0 0
    %1835 = vmatpush1.bf16.msra.mxu0 %v1821
    %1836 = vmatprep.subr.bf16.mxu0 0
    %1837 = vmatpush1.bf16.msra.mxu0 %v1822
    %1838 = vmatprep.subr.bf16.mxu0 0
    %1839 = vmatpush1.bf16.msra.mxu0 0
    %1840 = vmatprep.subr.bf16.mxu0 0
    %1841 = vmatpush1.bf16.msra.mxu0 0
    %1842 = vmatprep.subr.bf16.mxu0 0
    %1843 = vmatpush1.bf16.msra.mxu0 0
    %1844 = vmatprep.subr.bf16.mxu0 0
    %1845 = vmatpush1.bf16.msra.mxu0 0
    %1846 = vmatprep.subr.bf16.mxu0 0
    %1847 = vmatpush1.bf16.msra.mxu0 0
    %1848 = vmatprep.subr.bf16.mxu0 0
    %1849 = vmatpush1.bf16.msra.mxu0 0
    %1850 = vmatprep.subr.bf16.mxu0 0
    %1851 = vmatpush1.bf16.msra.mxu0 0
    %1852 = vmatprep.subr.bf16.mxu0 0
    %1853 = vmatpush1.bf16.msra.mxu0 0
    %1854 = vmatprep.subr.bf16.mxu0 0
    %1855 = vmatpush1.bf16.msra.mxu0 0
    %1856 = vmatprep.subr.bf16.mxu0 0
    %1857 = vmatpush1.bf16.msra.mxu0 0
    %1858 = vmatprep.subr.bf16.mxu0 0
    %1859 = vmatpush1.bf16.msra.mxu0 0
    %1860 = vmatprep.subr.bf16.mxu0 0
    %1861 = vmatpush1.bf16.msra.mxu0 0
    %1862 = vmatprep.mubr.bf16.mxu0 0
    %1863 = vmatmul.mubr.bf16.gmra.mrb[0].mxu0 %v1828
    %v1864 = vpop.f32.mrb[0].mxu0
    %v1865 = vadd.f32 0.0, %v1864
    %v1866 = vpop.f32.mrb[0].mxu0
    %v1867 = vpop.f32.mrb[0].mxu0
    %v1868 = vpop.f32.mrb[0].mxu0
    %1869 = vdwg.mxu0
    %v1870 = vld [vmem:[#allocation3] sm:$0xff]
    %v1871 = vadd.f32 %v1870, %v1865
    %1872 = vst.msk [vmem:[#allocation3] sm:$0xff] %vm1471, %v1871
    %v1873 = vpack.c.bf16 %v1382, %v1382
    %s1874 = scalar_lea.vmem %s4, 192
    %v1875 = vld [vmem:[%s1874] sm:$0xf]
    %v1876 = vld [vmem:[%s1874 + $0x4] sm:$0xf]
    %v1877 = vld [vmem:[%s1874 + $0x8] sm:$0xf]
    %v1878 = vld [vmem:[%s1874 + $0xc] sm:$0xf]
    %v1879 = vld [vmem:[%s1874 + $0x10] sm:$0xf]
    %v1880 = vld [vmem:[%s1874 + $0x14] sm:$0xf]
    %v1881 = vld [vmem:[%s1874 + $0x18] sm:$0xf]
    %v1882 = vld [vmem:[%s1874 + $0x1c] sm:$0xf]
    %v1891 = vunpack.c.l.b16 %v1875
    %v1892 = vunpack.c.l.b16 %v1876
    %v1893 = vunpack.c.l.b16 %v1877
    %v1894 = vunpack.c.l.b16 %v1878
    %v1895 = vunpack.c.l.b16 %v1879
    %v1896 = vunpack.c.l.b16 %v1880
    %v1897 = vunpack.c.l.b16 %v1881
    %v1898 = vunpack.c.l.b16 %v1882
    %v1899 = vpack.c.b16 %v1892, %v1891
    %v1900 = vpack.c.b16 %v1894, %v1893
    %v1901 = vpack.c.b16 %v1896, %v1895
    %v1902 = vpack.c.b16 %v1898, %v1897
    %v1908 = vsel %vm125, %v1873, 0
    %1910 = vmatprep.subr.bf16.mxu0 0
    %1911 = vmatpush1.bf16.msra.mxu0 %v1899
    %1912 = vmatprep.subr.bf16.mxu0 0
    %1913 = vmatpush1.bf16.msra.mxu0 %v1900
    %1914 = vmatprep.subr.bf16.mxu0 0
    %1915 = vmatpush1.bf16.msra.mxu0 %v1901
    %1916 = vmatprep.subr.bf16.mxu0 0
    %1917 = vmatpush1.bf16.msra.mxu0 %v1902
    %1918 = vmatprep.subr.bf16.mxu0 0
    %1919 = vmatpush1.bf16.msra.mxu0 0
    %1920 = vmatprep.subr.bf16.mxu0 0
    %1921 = vmatpush1.bf16.msra.mxu0 0
    %1922 = vmatprep.subr.bf16.mxu0 0
    %1923 = vmatpush1.bf16.msra.mxu0 0
    %1924 = vmatprep.subr.bf16.mxu0 0
    %1925 = vmatpush1.bf16.msra.mxu0 0
    %1926 = vmatprep.subr.bf16.mxu0 0
    %1927 = vmatpush1.bf16.msra.mxu0 0
    %1928 = vmatprep.subr.bf16.mxu0 0
    %1929 = vmatpush1.bf16.msra.mxu0 0
    %1930 = vmatprep.subr.bf16.mxu0 0
    %1931 = vmatpush1.bf16.msra.mxu0 0
    %1932 = vmatprep.subr.bf16.mxu0 0
    %1933 = vmatpush1.bf16.msra.mxu0 0
    %1934 = vmatprep.subr.bf16.mxu0 0
    %1935 = vmatpush1.bf16.msra.mxu0 0
    %1936 = vmatprep.subr.bf16.mxu0 0
    %1937 = vmatpush1.bf16.msra.mxu0 0
    %1938 = vmatprep.subr.bf16.mxu0 0
    %1939 = vmatpush1.bf16.msra.mxu0 0
    %1940 = vmatprep.subr.bf16.mxu0 0
    %1941 = vmatpush1.bf16.msra.mxu0 0
    %1942 = vmatprep.mubr.bf16.mxu0 0
    %1943 = vmatmul.mubr.bf16.gmra.mrb[0].mxu0 %v1908
    %v1944 = vpop.f32.mrb[0].mxu0
    %v1945 = vadd.f32 0.0, %v1944
    %v1946 = vpop.f32.mrb[0].mxu0
    %v1947 = vpop.f32.mrb[0].mxu0
    %v1948 = vpop.f32.mrb[0].mxu0
    %1949 = vdwg.mxu0
    %v1950 = vld [vmem:[#allocation3] sm:$0xff]
    %v1951 = vadd.f32 %v1950, %v1945
    %1952 = vst.msk [vmem:[#allocation3] sm:$0xff] %vm1471, %v1951
    %v1953 = vpack.c.bf16 %v1385, %v1385
    %s1954 = scalar_lea.vmem %s4, 224
    %v1955 = vld [vmem:[%s1954] sm:$0xf]
    %v1956 = vld [vmem:[%s1954 + $0x4] sm:$0xf]
    %v1957 = vld [vmem:[%s1954 + $0x8] sm:$0xf]
    %v1958 = vld [vmem:[%s1954 + $0xc] sm:$0xf]
    %v1959 = vld [vmem:[%s1954 + $0x10] sm:$0xf]
    %v1960 = vld [vmem:[%s1954 + $0x14] sm:$0xf]
    %v1961 = vld [vmem:[%s1954 + $0x18] sm:$0xf]
    %v1962 = vld [vmem:[%s1954 + $0x1c] sm:$0xf]
    %v1971 = vunpack.c.l.b16 %v1955
    %v1972 = vunpack.c.l.b16 %v1956
    %v1973 = vunpack.c.l.b16 %v1957
    %v1974 = vunpack.c.l.b16 %v1958
    %v1975 = vunpack.c.l.b16 %v1959
    %v1976 = vunpack.c.l.b16 %v1960
    %v1977 = vunpack.c.l.b16 %v1961
    %v1978 = vunpack.c.l.b16 %v1962
    %v1979 = vpack.c.b16 %v1972, %v1971
    %v1980 = vpack.c.b16 %v1974, %v1973
    %v1981 = vpack.c.b16 %v1976, %v1975
    %v1982 = vpack.c.b16 %v1978, %v1977
    %v1988 = vsel %vm125, %v1953, 0
    %1990 = vmatprep.subr.bf16.mxu0 0
    %1991 = vmatpush1.bf16.msra.mxu0 %v1979
    %1992 = vmatprep.subr.bf16.mxu0 0
    %1993 = vmatpush1.bf16.msra.mxu0 %v1980
    %1994 = vmatprep.subr.bf16.mxu0 0
    %1995 = vmatpush1.bf16.msra.mxu0 %v1981
    %1996 = vmatprep.subr.bf16.mxu0 0
    %1997 = vmatpush1.bf16.msra.mxu0 %v1982
    %1998 = vmatprep.subr.bf16.mxu0 0
    %1999 = vmatpush1.bf16.msra.mxu0 0
    %2000 = vmatprep.subr.bf16.mxu0 0
    %2001 = vmatpush1.bf16.msra.mxu0 0
    %2002 = vmatprep.subr.bf16.mxu0 0
    %2003 = vmatpush1.bf16.msra.mxu0 0
    %2004 = vmatprep.subr.bf16.mxu0 0
    %2005 = vmatpush1.bf16.msra.mxu0 0
    %2006 = vmatprep.subr.bf16.mxu0 0
    %2007 = vmatpush1.bf16.msra.mxu0 0
    %2008 = vmatprep.subr.bf16.mxu0 0
    %2009 = vmatpush1.bf16.msra.mxu0 0
    %2010 = vmatprep.subr.bf16.mxu0 0
    %2011 = vmatpush1.bf16.msra.mxu0 0
    %2012 = vmatprep.subr.bf16.mxu0 0
    %2013 = vmatpush1.bf16.msra.mxu0 0
    %2014 = vmatprep.subr.bf16.mxu0 0
    %2015 = vmatpush1.bf16.msra.mxu0 0
    %2016 = vmatprep.subr.bf16.mxu0 0
    %2017 = vmatpush1.bf16.msra.mxu0 0
    %2018 = vmatprep.subr.bf16.mxu0 0
    %2019 = vmatpush1.bf16.msra.mxu0 0
    %2020 = vmatprep.subr.bf16.mxu0 0
    %2021 = vmatpush1.bf16.msra.mxu0 0
    %2022 = vmatprep.mubr.bf16.mxu0 0
    %2023 = vmatmul.mubr.bf16.gmra.mrb[0].mxu0 %v1988
    %v2024 = vpop.f32.mrb[0].mxu0
    %v2025 = vadd.f32 0.0, %v2024
    %v2026 = vpop.f32.mrb[0].mxu0
    %v2027 = vpop.f32.mrb[0].mxu0
    %v2028 = vpop.f32.mrb[0].mxu0
    %2029 = vdwg.mxu0
    %v2030 = vld [vmem:[#allocation3] sm:$0xff]
    %v2031 = vadd.f32 %v2030, %v2025
    %2032 = vst.msk [vmem:[#allocation3] sm:$0xff] %vm1471, %v2031
    %v2033 = vpack.c.bf16 %v1390, %v1390
    %s2034 = scalar_lea.vmem %s4, 256
    %v2035 = vld [vmem:[%s2034] sm:$0xf]
    %v2036 = vld [vmem:[%s2034 + $0x4] sm:$0xf]
    %v2037 = vld [vmem:[%s2034 + $0x8] sm:$0xf]
    %v2038 = vld [vmem:[%s2034 + $0xc] sm:$0xf]
    %v2039 = vld [vmem:[%s2034 + $0x10] sm:$0xf]
    %v2040 = vld [vmem:[%s2034 + $0x14] sm:$0xf]
    %v2041 = vld [vmem:[%s2034 + $0x18] sm:$0xf]
    %v2042 = vld [vmem:[%s2034 + $0x1c] sm:$0xf]
    %v2051 = vunpack.c.l.b16 %v2035
    %v2052 = vunpack.c.l.b16 %v2036
    %v2053 = vunpack.c.l.b16 %v2037
    %v2054 = vunpack.c.l.b16 %v2038
    %v2055 = vunpack.c.l.b16 %v2039
    %v2056 = vunpack.c.l.b16 %v2040
    %v2057 = vunpack.c.l.b16 %v2041
    %v2058 = vunpack.c.l.b16 %v2042
    %v2059 = vpack.c.b16 %v2052, %v2051
    %v2060 = vpack.c.b16 %v2054, %v2053
    %v2061 = vpack.c.b16 %v2056, %v2055
    %v2062 = vpack.c.b16 %v2058, %v2057
    %v2068 = vsel %vm125, %v2033, 0
    %2070 = vmatprep.subr.bf16.mxu0 0
    %2071 = vmatpush1.bf16.msra.mxu0 %v2059
    %2072 = vmatprep.subr.bf16.mxu0 0
    %2073 = vmatpush1.bf16.msra.mxu0 %v2060
    %2074 = vmatprep.subr.bf16.mxu0 0
    %2075 = vmatpush1.bf16.msra.mxu0 %v2061
    %2076 = vmatprep.subr.bf16.mxu0 0
    %2077 = vmatpush1.bf16.msra.mxu0 %v2062
    %2078 = vmatprep.subr.bf16.mxu0 0
    %2079 = vmatpush1.bf16.msra.mxu0 0
    %2080 = vmatprep.subr.bf16.mxu0 0
    %2081 = vmatpush1.bf16.msra.mxu0 0
    %2082 = vmatprep.subr.bf16.mxu0 0
    %2083 = vmatpush1.bf16.msra.mxu0 0
    %2084 = vmatprep.subr.bf16.mxu0 0
    %2085 = vmatpush1.bf16.msra.mxu0 0
    %2086 = vmatprep.subr.bf16.mxu0 0
    %2087 = vmatpush1.bf16.msra.mxu0 0
    %2088 = vmatprep.subr.bf16.mxu0 0
    %2089 = vmatpush1.bf16.msra.mxu0 0
    %2090 = vmatprep.subr.bf16.mxu0 0
    %2091 = vmatpush1.bf16.msra.mxu0 0
    %2092 = vmatprep.subr.bf16.mxu0 0
    %2093 = vmatpush1.bf16.msra.mxu0 0
    %2094 = vmatprep.subr.bf16.mxu0 0
    %2095 = vmatpush1.bf16.msra.mxu0 0
    %2096 = vmatprep.subr.bf16.mxu0 0
    %2097 = vmatpush1.bf16.msra.mxu0 0
    %2098 = vmatprep.subr.bf16.mxu0 0
    %2099 = vmatpush1.bf16.msra.mxu0 0
    %2100 = vmatprep.subr.bf16.mxu0 0
    %2101 = vmatpush1.bf16.msra.mxu0 0
    %2102 = vmatprep.mubr.bf16.mxu0 0
    %2103 = vmatmul.mubr.bf16.gmra.mrb[0].mxu0 %v2068
    %v2104 = vpop.f32.mrb[0].mxu0
    %v2105 = vadd.f32 0.0, %v2104
    %v2106 = vpop.f32.mrb[0].mxu0
    %v2107 = vpop.f32.mrb[0].mxu0
    %v2108 = vpop.f32.mrb[0].mxu0
    %2109 = vdwg.mxu0
    %v2110 = vld [vmem:[#allocation3] sm:$0xff]
    %v2111 = vadd.f32 %v2110, %v2105
    %2112 = vst.msk [vmem:[#allocation3] sm:$0xff] %vm1471, %v2111
    %v2113 = vld [vmem:[#allocation3] sm:$0xff]
    %v2114 = vld [vmem:[%s5] sm:$0xff]
    %v2115 = vld [vmem:[%s5 + $0x8] sm:$0xff]
    %v2116 = vld [vmem:[%s5 + $0x10] sm:$0xff]
    %v2117 = vld [vmem:[%s5 + $0x18] sm:$0xff]
    %v2119 = vsel %vm1471, %v2113, 0
    %2121 = vmatprep.subr.mxu0 0.0
    %2122 = vmatpush1.msra.mxu0 %v2114
    %2123 = vmatprep.subr.mxu0 0.0
    %2124 = vmatpush1.msra.mxu0 %v2115
    %2125 = vmatprep.subr.mxu0 0.0
    %2126 = vmatpush1.msra.mxu0 %v2116
    %2127 = vmatprep.subr.mxu0 0.0
    %2128 = vmatpush1.msra.mxu0 %v2117
    %2129 = vmatprep.subr.mxu0 0.0
    %2130 = vmatpush1.msra.mxu0 0.0
    %2131 = vmatprep.subr.mxu0 0.0
    %2132 = vmatpush1.msra.mxu0 0.0
    %2133 = vmatprep.subr.mxu0 0.0
    %2134 = vmatpush1.msra.mxu0 0.0
    %2135 = vmatprep.subr.mxu0 0.0
    %2136 = vmatpush1.msra.mxu0 0.0
    %2137 = vmatprep.subr.mxu0 0.0
    %2138 = vmatpush1.msra.mxu0 0.0
    %2139 = vmatprep.subr.mxu0 0.0
    %2140 = vmatpush1.msra.mxu0 0.0
    %2141 = vmatprep.subr.mxu0 0.0
    %2142 = vmatpush1.msra.mxu0 0.0
    %2143 = vmatprep.subr.mxu0 0.0
    %2144 = vmatpush1.msra.mxu0 0.0
    %2145 = vmatprep.subr.mxu0 0.0
    %2146 = vmatpush1.msra.mxu0 0.0
    %2147 = vmatprep.subr.mxu0 0.0
    %2148 = vmatpush1.msra.mxu0 0.0
    %2149 = vmatprep.subr.mxu0 0.0
    %2150 = vmatpush1.msra.mxu0 0.0
    %2151 = vmatprep.subr.mxu0 0.0
    %2152 = vmatpush1.msra.mxu0 0.0
    %2153 = vmatprep.subr.mxu0 0.0
    %2154 = vmatpush1.msra.mxu0 0.0
    %2155 = vmatprep.subr.mxu0 0.0
    %2156 = vmatpush1.msra.mxu0 0.0
    %2157 = vmatprep.subr.mxu0 0.0
    %2158 = vmatpush1.msra.mxu0 0.0
    %2159 = vmatprep.subr.mxu0 0.0
    %2160 = vmatpush1.msra.mxu0 0.0
    %2161 = vmatprep.subr.mxu0 0.0
    %2162 = vmatpush1.msra.mxu0 0.0
    %2163 = vmatprep.subr.mxu0 0.0
    %2164 = vmatpush1.msra.mxu0 0.0
    %2165 = vmatprep.subr.mxu0 0.0
    %2166 = vmatpush1.msra.mxu0 0.0
    %2167 = vmatprep.subr.mxu0 0.0
    %2168 = vmatpush1.msra.mxu0 0.0
    %2169 = vmatprep.subr.mxu0 0.0
    %2170 = vmatpush1.msra.mxu0 0.0
    %2171 = vmatprep.subr.mxu0 0.0
    %2172 = vmatpush1.msra.mxu0 0.0
    %2173 = vmatprep.subr.mxu0 0.0
    %2174 = vmatpush1.msra.mxu0 0.0
    %2175 = vmatprep.subr.mxu0 0.0
    %2176 = vmatpush1.msra.mxu0 0.0
    %2177 = vmatprep.subr.mxu0 0.0
    %2178 = vmatpush1.msra.mxu0 0.0
    %2179 = vmatprep.subr.mxu0 0.0
    %2180 = vmatpush1.msra.mxu0 0.0
    %2181 = vmatprep.subr.mxu0 0.0
    %2182 = vmatpush1.msra.mxu0 0.0
    %2183 = vmatprep.subr.mxu0 0.0
    %2184 = vmatpush1.msra.mxu0 0.0
    %2185 = vmatprep.mubr.f32.mxu0 0.0
    %2186 = vmatmul.mubr.f32.gmra.mrb[0].mxu0 %v2119
    %v2187 = vpop.f32.mrb[0].mxu0
    %v2188 = vadd.f32 0.0, %v2187
    %v2189 = vpop.f32.mrb[0].mxu0
    %2190 = vdwg.mxu0
    %vm2191 = vcmask 15360
    %v2192 = vsel %vm2191, %v2188, 0.0
    %v2193 = vrot.slane %v2192, 4
    %v2194 = vadd.f32 %v2192, %v2193
    %v2195 = vrot.slane %v2194, 2
    %v2196 = vadd.f32 %v2194, %v2195
    %v2197 = vrot.slane %v2196, 1
    %v2198 = vadd.f32 %v2196, %v2197
    %v2199 = vld [vmem:[#allocation4] sm:$0x1]
    %2201 = vset.pattern.permute.xlu0 0
    %2202 = vperm.xlu0 %2201, %v2199
    %v2203 = vpop.permute.xlu0 %2202
    %v2205 = vlaneseq
    %v2206 = vshrl.u32 %v2205, 7
    %v2207 = vsub.s32 0, %v2206
    %v2208 = vrot.slane %v2203, %v2207
    %v2209 = vadd.f32 %v2198, %v2208
    %vm2210 = vcmask 8192
    %2211 = vst.msk [vmem:[#allocation5] sm:$0x1] %vm2210, %v2209
    // Predicated region
    $region30: #{conv3d_classifier_forward.1} parent=1 // pred_check
      _
    $region31: #{conv3d_classifier_forward.1} parent=1 // pred_check_branch
      %2213 = sbr.rel (0) target = $region33
    $region32: #{conv3d_classifier_forward.1} parent=1 // pred_region
      %s2215 = ssub.s32 16, 16
      %2216 = vsyncadd [#allocation6], %s2215
      %s2218 = sshll.u32 [#allocation5], 4
      %s2219 = int_to_ptr.vmem [resolvable:$true] %s2218
      %2221 = dma.vmem_to_hbm [thread:$0]  %s2219, 16, %s7, [#allocation6]
    $region33: #{conv3d_classifier_forward.1} parent=1 // pred_fallthru
      _
    // Predicated region
    $region34: #{conv3d_classifier_forward.1} parent=1 // pred_check
      _
    $region35: #{conv3d_classifier_forward.1} parent=1 // pred_check_branch
      %2223 = sbr.rel (0) target = $region37
    $region36: #{conv3d_classifier_forward.1} parent=1 // pred_region
      %2224 = dma.done [#allocation6], 16
    $region37: #{conv3d_classifier_forward.1} parent=1 // pred_fallthru
      _
    %2225 = vsyncpa [#allocation6], 1

</llo_original>
